<compile_context>
chip_gen: v7x
topology: tpu7x:2x2x1
jax: 0.10.0
libtpu: 0.0.40
codegen_flags: <defaults>
</compile_context>

<pallas_src>
import jax
import jax.numpy as jnp
import numpy as np
from jax import lax
from jax.experimental import pallas as pl
from jax.experimental.pallas import tpu as pltpu


def _round_up(x, m):
    return (x + m - 1) // m * m


def _pad_axis(a, size, axis):
    pad = [(0, 0)] * a.ndim
    pad[axis] = (0, size - a.shape[axis])
    return jnp.pad(a, pad)


# ----------------------------------------------------------------------------
# Host-side constants for the depthwise stage.
# ----------------------------------------------------------------------------
def _dw_masks(H, W):
    """(9, 1, H*W) f32 masks: mask[t, 0, i*W+j] = 1 iff tap t reads a real
    (non zero-padding) pixel at stride-1 output position (i, j)."""
    i = np.arange(H)[:, None]
    j = np.arange(W)[None, :]
    masks = []
    for t in range(9):
        oy, ox = t // 3 - 1, t % 3 - 1
        m = (i + oy >= 0) & (i + oy < H) & (j + ox >= 0) & (j + ox < W)
        masks.append(m.astype(np.float32).reshape(1, H * W))
    return jnp.asarray(np.stack(masks, axis=0))                  # (9, 1, H*W)


def _decimation_matrix(H, W, Ho, Wo, stride):
    """(H*W, Ho*Wo) 0/1 selection matrix picking the strided output grid."""
    dst = np.arange(Ho * Wo)
    src = (dst // Wo) * stride * W + (dst % Wo) * stride
    d = np.zeros((H * W, Ho * Wo), np.float32)
    d[src, dst] = 1.0
    return jnp.asarray(d, jnp.bfloat16)


# ----------------------------------------------------------------------------
# Fused InvertedResidual kernel: expand(1x1) -> depthwise(3x3) -> project(1x1)
# (+residual), entirely in vregs; in-kernel layout (C, H*W), lane-dense.
# ----------------------------------------------------------------------------
def _fused_kernel(*, has_expand, add_residual, stride, H, W):
    HW = H * W

    def kernel(*refs):
        it = iter(refs)
        x_ref = next(it)
        if has_expand:
            we_ref, be_ref = next(it), next(it)
        wd_ref, bd_ref, mk_ref = next(it), next(it), next(it)
        wp_ref, bp_ref = next(it), next(it)
        if stride != 1:
            dsel_ref = next(it)
        o_ref = next(it)

        x = x_ref[0]                                            # (Cin, H*W) f32

        # -- 1) expand 1x1 conv: MXU, bf16 x bf16 -> f32 accum, + bias, ReLU6 --
        if has_expand:
            h = jnp.dot(we_ref[...], x.astype(jnp.bfloat16),
                        preferred_element_type=jnp.float32)     # (Cp, H*W)
            h = jnp.clip(h + be_ref[...], 0.0, 6.0)
        else:
            h = x                                               # (Cp == Cin, H*W)

        # -- 2) depthwise 3x3 (padding=1), whole-image rolled taps -------------
        # tap(dy,dx)[k] = h[k + (dy-1)*W + (dx-1)]  (masked at row/col borders)
        # Rolls live on the XLU, masks/weights are cheap VPU broadcasts; no
        # halo scratch, no zeroing, no per-row loops, no masked partial stores.
        acc = h * wd_ref[4]                                     # center tap, mask == 1
        for t in range(9):
            if t == 4:
                continue
            oy, ox = t // 3 - 1, t % 3 - 1
            shift = (-(oy * W + ox)) % HW                       # jnp.roll semantics
            tap = pltpu.roll(h, shift, axis=1)
            acc = acc + (tap * mk_ref[t]) * wd_ref[t]
        h2 = jnp.clip(acc + bd_ref[...], 0.0, 6.0)              # (Cp, H*W) f32

        # stride 2: decimate ONCE with an exact 0/1 selection matmul (MXU)
        # instead of repeated lane-strided gathers.
        if stride != 1:
            h2 = jnp.dot(h2.astype(jnp.bfloat16), dsel_ref[...],
                         preferred_element_type=jnp.float32)    # (Cp, Ho*Wo)

        # -- 3) project 1x1 conv (MXU) + bias (+ f32 residual) -----------------
        y = jnp.dot(wp_ref[...], h2.astype(jnp.bfloat16),
                    preferred_element_type=jnp.float32)         # (Cout, Ho*Wo)
        y = y + bp_ref[...]
        if add_residual:
            y = y + x
        o_ref[0] = y.astype(o_ref.dtype)                        # single lane-dense store

    return kernel


# ----------------------------------------------------------------------------
# Forward wrapper: NCHW in / NCHW out (like the PyTorch module); only free
# reshapes (N, C, H, W) <-> (N, C, H*W), no HBM transposes.
# ----------------------------------------------------------------------------
def inverted_residual_forward(x_nchw, params, *, stride, expand_ratio):
    N, Cin, H, W = x_nchw.shape
    oup, Cp = params["w_proj_t"].shape
    has_expand = expand_ratio != 1
    identity = (stride == 1) and (Cin == oup)
    Ho = (H + 2 - 3) // stride + 1
    Wo = (W + 2 - 3) // stride + 1
    HW, HoWo = H * W, Ho * Wo

    x_flat = x_nchw.reshape(N, Cin, HW)                         # free reshape

    kernel = _fused_kernel(has_expand=has_expand, add_residual=identity,
                           stride=stride, H=H, W=W)

    in_specs = [pl.BlockSpec((1, Cin, HW), lambda n: (n, 0, 0))]
    args = [x_flat]
    if has_expand:
        in_specs += [pl.BlockSpec((Cp, Cin), lambda n: (0, 0)),
                     pl.BlockSpec((Cp, 1), lambda n: (0, 0))]
        args += [params["w_exp_t"], params["b_exp"]]
    in_specs += [pl.BlockSpec((9, Cp, 1), lambda n: (0, 0, 0)),
                 pl.BlockSpec((Cp, 1), lambda n: (0, 0)),
                 pl.BlockSpec((9, 1, HW), lambda n: (0, 0, 0)),
                 pl.BlockSpec((oup, Cp), lambda n: (0, 0)),
                 pl.BlockSpec((oup, 1), lambda n: (0, 0))]
    args += [params["w_dw9"], params["b_dw"], _dw_masks(H, W),
             params["w_proj_t"], params["b_proj"]]
    if stride != 1:
        in_specs += [pl.BlockSpec((HW, HoWo), lambda n: (0, 0))]
        args += [_decimation_matrix(H, W, Ho, Wo, stride)]

    out = pl.pallas_call(
        kernel,
        out_shape=jax.ShapeDtypeStruct((N, oup, HoWo), jnp.float32),
        grid=(N,),
        in_specs=in_specs,
        out_specs=pl.BlockSpec((1, oup, HoWo), lambda n: (n, 0, 0)),
        compiler_params=pltpu.CompilerParams(
            dimension_semantics=("parallel",),
            vmem_limit_bytes=64 * 1024 * 1024),
    )(*args)
    return out.reshape(N, oup, Ho, Wo)


# ----------------------------------------------------------------------------
# Deterministic parameter construction (BN folded into weights) + f32 reference
# ----------------------------------------------------------------------------
def _fold_bn(gamma, beta, mean, var, eps=1e-5):
    scale = gamma / jnp.sqrt(var + eps)
    return scale, beta - mean * scale


def make_params(key, inp, oup, expand_ratio):
    hidden = int(round(inp * expand_ratio))
    has_expand = expand_ratio != 1
    Cp = _round_up(hidden, 8) if has_expand else hidden

    def bn_raw(k, c):
        k1, k2, k3, k4 = jax.random.split(k, 4)
        gamma = 1.0 + 0.1 * jax.random.normal(k1, (c,), jnp.float32)
        beta = 0.1 * jax.random.normal(k2, (c,), jnp.float32)
        mean = 0.1 * jax.random.normal(k3, (c,), jnp.float32)
        var = 0.5 + 0.5 * jax.random.uniform(k4, (c,), jnp.float32)
        return gamma, beta, mean, var

    ks = jax.random.split(key, 6)
    raw = {}
    if has_expand:
        raw["w_exp_oihw"] = 0.2 * jax.random.normal(ks[0], (hidden, inp, 1, 1), jnp.float32)
        raw["bn1"] = bn_raw(ks[1], hidden)
    raw["w_dw_oihw"] = 0.2 * jax.random.normal(ks[2], (hidden, 1, 3, 3), jnp.float32)
    raw["bn2"] = bn_raw(ks[3], hidden)
    raw["w_proj_oihw"] = 0.2 * jax.random.normal(ks[4], (oup, hidden, 1, 1), jnp.float32)
    raw["bn3"] = bn_raw(ks[5], oup)

    s2, b2 = _fold_bn(*raw["bn2"])
    s3, b3 = _fold_bn(*raw["bn3"])

    params = {}
    if has_expand:
        s1, b1 = _fold_bn(*raw["bn1"])
        w_exp_t = raw["w_exp_oihw"][:, :, 0, 0] * s1[:, None]           # (hidden, inp)
        params["w_exp_t"] = _pad_axis(w_exp_t, Cp, 0).astype(jnp.bfloat16)
        params["b_exp"] = _pad_axis(b1[:, None], Cp, 0)                 # (Cp, 1) f32
    w_dw9 = (raw["w_dw_oihw"][:, 0].reshape(hidden, 9) * s2[:, None]).T  # (9, hidden)
    params["w_dw9"] = _pad_axis(w_dw9, Cp, 1)[..., None]                # (9, Cp, 1) f32
    params["b_dw"] = _pad_axis(b2[:, None], Cp, 0)                      # (Cp, 1) f32
    w_proj_t = raw["w_proj_oihw"][:, :, 0, 0] * s3[:, None]             # (oup, hidden)
    params["w_proj_t"] = _pad_axis(w_proj_t, Cp, 1).astype(jnp.bfloat16)
    params["b_proj"] = b3[:, None]                                      # (oup, 1) f32
    return params, raw


def reference_forward(x, raw, *, stride, expand_ratio):
    dn = ("NCHW", "OIHW", "NCHW")
    eps = 1e-5
    prec = lax.Precision.HIGHEST

    def bn(y, g, b, m, v):
        s = g / jnp.sqrt(v + eps)
        return y * s[None, :, None, None] + (b - m * s)[None, :, None, None]

    h = x
    if expand_ratio != 1:
        h = lax.conv_general_dilated(h, raw["w_exp_oihw"], (1, 1), "VALID",
                                     dimension_numbers=dn, precision=prec)
        h = jnp.clip(bn(h, *raw["bn1"]), 0.0, 6.0)
    h = lax.conv_general_dilated(h, raw["w_dw_oihw"], (stride, stride),
                                 ((1, 1), (1, 1)), dimension_numbers=dn,
                                 feature_group_count=raw["w_dw_oihw"].shape[0],
                                 precision=prec)
    h = jnp.clip(bn(h, *raw["bn2"]), 0.0, 6.0)
    h = lax.conv_general_dilated(h, raw["w_proj_oihw"], (1, 1), "VALID",
                                 dimension_numbers=dn, precision=prec)
    h = bn(h, *raw["bn3"])
    identity = (stride == 1) and (x.shape[1] == raw["w_proj_oihw"].shape[0])
    return x + h if identity else h


# ----------------------------------------------------------------------------
if __name__ == "__main__":
    key = jax.random.PRNGKey(0)
    N, H, W = 2, 16, 16

    configs = [
        # (inp, oup, stride, expand_ratio)
        (8, 8, 1, 4),     # identity / residual path, expand
        (8, 16, 1, 4),    # projection-only path, expand
        (8, 16, 2, 4),    # stride-2 path (selection-matmul decimation)
        (16, 16, 1, 1),   # expand_ratio == 1 path (depthwise on input), identity
    ]

    for inp, oup, stride, er in configs:
        kx, kp, key = jax.random.split(key, 3)
        x = jax.random.normal(kx, (N, inp, H, W), jnp.float32)   # NCHW like PyTorch
        params, raw = make_params(kp, inp, oup, er)

        out = inverted_residual_forward(x, params, stride=stride, expand_ratio=er)
        out = jax.block_until_ready(out)

        ref = jax.block_until_ready(
            reference_forward(x, raw, stride=stride, expand_ratio=er))

        Ho = (H + 2 - 3) // stride + 1
        Wo = (W + 2 - 3) // stride + 1
        assert out.shape == ref.shape == (N, oup, Ho, Wo)
        # bf16 MXU operands (f32 accumulation) vs. pure-f32 reference -> loosened tol.
        np.testing.assert_allclose(np.asarray(out), np.asarray(ref),
                                   rtol=2e-2, atol=2e-2)

    print("KERNEL_OK")
</pallas_src>

<mosaic_0001>
module attributes {stable_mosaic.version = 11 : i64} {
  func.func @kernel(%arg0: i32, %arg1: memref<1x8x256xf32, #tpu.memory_space<vmem>>, %arg2: memref<32x8xbf16, #tpu.memory_space<vmem>>, %arg3: memref<32x1xf32, #tpu.memory_space<vmem>>, %arg4: memref<9x32x1xf32, #tpu.memory_space<vmem>>, %arg5: memref<32x1xf32, #tpu.memory_space<vmem>>, %arg6: memref<9x1x256xf32, #tpu.memory_space<vmem>>, %arg7: memref<8x32xbf16, #tpu.memory_space<vmem>>, %arg8: memref<8x1xf32, #tpu.memory_space<vmem>>, %arg9: memref<1x8x256xf32, #tpu.memory_space<vmem>>) attributes {dimension_semantics = [#tpu.dimension_semantics<parallel>], iteration_bounds = array<i64: 2>, scalar_prefetch = 0 : i64, scratch_operands = 0 : i64, tpu.core_type = #tpu.core_type<tc>, window_params = [{transform_indices = @transform_0, window_bounds = array<i64: 1, 8, 256>}, {pipeline_mode = #tpu.pipeline_mode<synchronous>, transform_indices = @transform_1, window_bounds = array<i64: 32, 8>}, {pipeline_mode = #tpu.pipeline_mode<synchronous>, transform_indices = @transform_2, window_bounds = array<i64: 32, 1>}, {pipeline_mode = #tpu.pipeline_mode<synchronous>, transform_indices = @transform_3, window_bounds = array<i64: 9, 32, 1>}, {pipeline_mode = #tpu.pipeline_mode<synchronous>, transform_indices = @transform_4, window_bounds = array<i64: 32, 1>}, {pipeline_mode = #tpu.pipeline_mode<synchronous>, transform_indices = @transform_5, window_bounds = array<i64: 9, 1, 256>}, {pipeline_mode = #tpu.pipeline_mode<synchronous>, transform_indices = @transform_6, window_bounds = array<i64: 8, 32>}, {pipeline_mode = #tpu.pipeline_mode<synchronous>, transform_indices = @transform_7, window_bounds = array<i64: 8, 1>}, {transform_indices = @transform_8, window_bounds = array<i64: 1, 8, 256>}]} {
    %c0 = arith.constant 0 : index
    %c0_0 = arith.constant 0 : index
    %c0_1 = arith.constant 0 : index
    %0 = vector.load %arg1[%c0, %c0_0, %c0_1] : memref<1x8x256xf32, #tpu.memory_space<vmem>>, vector<1x8x256xf32>
    %1 = vector.shape_cast %0 : vector<1x8x256xf32> to vector<8x256xf32>
    %c0_2 = arith.constant 0 : index
    %c0_3 = arith.constant 0 : index
    %2 = vector.load %arg2[%c0_2, %c0_3] : memref<32x8xbf16, #tpu.memory_space<vmem>>, vector<32x8xbf16>
    %3 = arith.truncf %1 : vector<8x256xf32> to vector<8x256xbf16>
    %cst = arith.constant dense<0.000000e+00> : vector<32x256xf32>
    %4 = tpu.matmul %2, %3, %cst {dimension_numbers = #tpu.dot_dimension_numbers<[1], [0], [0], [1], [0, 0, 1, 1], [], []>} : vector<32x8xbf16>, vector<8x256xbf16>, vector<32x256xf32> -> vector<32x256xf32>
    %c0_4 = arith.constant 0 : index
    %c0_5 = arith.constant 0 : index
    %5 = vector.load %arg3[%c0_4, %c0_5] : memref<32x1xf32, #tpu.memory_space<vmem>>, vector<32x1xf32>
    %6 = vector.broadcast %5 : vector<32x1xf32> to vector<32x256xf32>
    %7 = arith.addf %4, %6 : vector<32x256xf32>
    %cst_6 = arith.constant 0.000000e+00 : f32
    %cst_7 = arith.constant 6.000000e+00 : f32
    %8 = vector.broadcast %cst_6 : f32 to vector<32x256xf32>
    %9 = arith.maximumf %8, %7 : vector<32x256xf32>
    %10 = vector.broadcast %cst_7 : f32 to vector<32x256xf32>
    %11 = arith.minimumf %10, %9 : vector<32x256xf32>
    %c4 = arith.constant 4 : index
    %c0_8 = arith.constant 0 : index
    %c0_9 = arith.constant 0 : index
    %12 = vector.load %arg4[%c4, %c0_8, %c0_9] : memref<9x32x1xf32, #tpu.memory_space<vmem>>, vector<1x32x1xf32>
    %13 = vector.shape_cast %12 : vector<1x32x1xf32> to vector<32x1xf32>
    %14 = vector.broadcast %13 : vector<32x1xf32> to vector<32x256xf32>
    %15 = arith.mulf %11, %14 : vector<32x256xf32>
    %c17_i32 = arith.constant 17 : i32
    %16 = tpu.dynamic_rotate %11 by %c17_i32 dim 1 : vector<32x256xf32>, i32 -> vector<32x256xf32>
    %c0_10 = arith.constant 0 : index
    %c0_11 = arith.constant 0 : index
    %c0_12 = arith.constant 0 : index
    %17 = vector.load %arg6[%c0_10, %c0_11, %c0_12] : memref<9x1x256xf32, #tpu.memory_space<vmem>>, vector<1x1x256xf32>
    %18 = vector.shape_cast %17 : vector<1x1x256xf32> to vector<1x256xf32>
    %19 = vector.broadcast %18 : vector<1x256xf32> to vector<32x256xf32>
    %20 = arith.mulf %16, %19 : vector<32x256xf32>
    %c0_13 = arith.constant 0 : index
    %c0_14 = arith.constant 0 : index
    %c0_15 = arith.constant 0 : index
    %21 = vector.load %arg4[%c0_13, %c0_14, %c0_15] : memref<9x32x1xf32, #tpu.memory_space<vmem>>, vector<1x32x1xf32>
    %22 = vector.shape_cast %21 : vector<1x32x1xf32> to vector<32x1xf32>
    %23 = vector.broadcast %22 : vector<32x1xf32> to vector<32x256xf32>
    %24 = arith.mulf %20, %23 : vector<32x256xf32>
    %25 = arith.addf %15, %24 : vector<32x256xf32>
    %c16_i32 = arith.constant 16 : i32
    %26 = tpu.dynamic_rotate %11 by %c16_i32 dim 1 : vector<32x256xf32>, i32 -> vector<32x256xf32>
    %c1 = arith.constant 1 : index
    %c0_16 = arith.constant 0 : index
    %c0_17 = arith.constant 0 : index
    %27 = vector.load %arg6[%c1, %c0_16, %c0_17] : memref<9x1x256xf32, #tpu.memory_space<vmem>>, vector<1x1x256xf32>
    %28 = vector.shape_cast %27 : vector<1x1x256xf32> to vector<1x256xf32>
    %29 = vector.broadcast %28 : vector<1x256xf32> to vector<32x256xf32>
    %30 = arith.mulf %26, %29 : vector<32x256xf32>
    %c1_18 = arith.constant 1 : index
    %c0_19 = arith.constant 0 : index
    %c0_20 = arith.constant 0 : index
    %31 = vector.load %arg4[%c1_18, %c0_19, %c0_20] : memref<9x32x1xf32, #tpu.memory_space<vmem>>, vector<1x32x1xf32>
    %32 = vector.shape_cast %31 : vector<1x32x1xf32> to vector<32x1xf32>
    %33 = vector.broadcast %32 : vector<32x1xf32> to vector<32x256xf32>
    %34 = arith.mulf %30, %33 : vector<32x256xf32>
    %35 = arith.addf %25, %34 : vector<32x256xf32>
    %c15_i32 = arith.constant 15 : i32
    %36 = tpu.dynamic_rotate %11 by %c15_i32 dim 1 : vector<32x256xf32>, i32 -> vector<32x256xf32>
    %c2 = arith.constant 2 : index
    %c0_21 = arith.constant 0 : index
    %c0_22 = arith.constant 0 : index
    %37 = vector.load %arg6[%c2, %c0_21, %c0_22] : memref<9x1x256xf32, #tpu.memory_space<vmem>>, vector<1x1x256xf32>
    %38 = vector.shape_cast %37 : vector<1x1x256xf32> to vector<1x256xf32>
    %39 = vector.broadcast %38 : vector<1x256xf32> to vector<32x256xf32>
    %40 = arith.mulf %36, %39 : vector<32x256xf32>
    %c2_23 = arith.constant 2 : index
    %c0_24 = arith.constant 0 : index
    %c0_25 = arith.constant 0 : index
    %41 = vector.load %arg4[%c2_23, %c0_24, %c0_25] : memref<9x32x1xf32, #tpu.memory_space<vmem>>, vector<1x32x1xf32>
    %42 = vector.shape_cast %41 : vector<1x32x1xf32> to vector<32x1xf32>
    %43 = vector.broadcast %42 : vector<32x1xf32> to vector<32x256xf32>
    %44 = arith.mulf %40, %43 : vector<32x256xf32>
    %45 = arith.addf %35, %44 : vector<32x256xf32>
    %c1_i32 = arith.constant 1 : i32
    %46 = tpu.dynamic_rotate %11 by %c1_i32 dim 1 : vector<32x256xf32>, i32 -> vector<32x256xf32>
    %c3 = arith.constant 3 : index
    %c0_26 = arith.constant 0 : index
    %c0_27 = arith.constant 0 : index
    %47 = vector.load %arg6[%c3, %c0_26, %c0_27] : memref<9x1x256xf32, #tpu.memory_space<vmem>>, vector<1x1x256xf32>
    %48 = vector.shape_cast %47 : vector<1x1x256xf32> to vector<1x256xf32>
    %49 = vector.broadcast %48 : vector<1x256xf32> to vector<32x256xf32>
    %50 = arith.mulf %46, %49 : vector<32x256xf32>
    %c3_28 = arith.constant 3 : index
    %c0_29 = arith.constant 0 : index
    %c0_30 = arith.constant 0 : index
    %51 = vector.load %arg4[%c3_28, %c0_29, %c0_30] : memref<9x32x1xf32, #tpu.memory_space<vmem>>, vector<1x32x1xf32>
    %52 = vector.shape_cast %51 : vector<1x32x1xf32> to vector<32x1xf32>
    %53 = vector.broadcast %52 : vector<32x1xf32> to vector<32x256xf32>
    %54 = arith.mulf %50, %53 : vector<32x256xf32>
    %55 = arith.addf %45, %54 : vector<32x256xf32>
    %c255_i32 = arith.constant 255 : i32
    %56 = tpu.dynamic_rotate %11 by %c255_i32 dim 1 : vector<32x256xf32>, i32 -> vector<32x256xf32>
    %c5 = arith.constant 5 : index
    %c0_31 = arith.constant 0 : index
    %c0_32 = arith.constant 0 : index
    %57 = vector.load %arg6[%c5, %c0_31, %c0_32] : memref<9x1x256xf32, #tpu.memory_space<vmem>>, vector<1x1x256xf32>
    %58 = vector.shape_cast %57 : vector<1x1x256xf32> to vector<1x256xf32>
    %59 = vector.broadcast %58 : vector<1x256xf32> to vector<32x256xf32>
    %60 = arith.mulf %56, %59 : vector<32x256xf32>
    %c5_33 = arith.constant 5 : index
    %c0_34 = arith.constant 0 : index
    %c0_35 = arith.constant 0 : index
    %61 = vector.load %arg4[%c5_33, %c0_34, %c0_35] : memref<9x32x1xf32, #tpu.memory_space<vmem>>, vector<1x32x1xf32>
    %62 = vector.shape_cast %61 : vector<1x32x1xf32> to vector<32x1xf32>
    %63 = vector.broadcast %62 : vector<32x1xf32> to vector<32x256xf32>
    %64 = arith.mulf %60, %63 : vector<32x256xf32>
    %65 = arith.addf %55, %64 : vector<32x256xf32>
    %c241_i32 = arith.constant 241 : i32
    %66 = tpu.dynamic_rotate %11 by %c241_i32 dim 1 : vector<32x256xf32>, i32 -> vector<32x256xf32>
    %c6 = arith.constant 6 : index
    %c0_36 = arith.constant 0 : index
    %c0_37 = arith.constant 0 : index
    %67 = vector.load %arg6[%c6, %c0_36, %c0_37] : memref<9x1x256xf32, #tpu.memory_space<vmem>>, vector<1x1x256xf32>
    %68 = vector.shape_cast %67 : vector<1x1x256xf32> to vector<1x256xf32>
    %69 = vector.broadcast %68 : vector<1x256xf32> to vector<32x256xf32>
    %70 = arith.mulf %66, %69 : vector<32x256xf32>
    %c6_38 = arith.constant 6 : index
    %c0_39 = arith.constant 0 : index
    %c0_40 = arith.constant 0 : index
    %71 = vector.load %arg4[%c6_38, %c0_39, %c0_40] : memref<9x32x1xf32, #tpu.memory_space<vmem>>, vector<1x32x1xf32>
    %72 = vector.shape_cast %71 : vector<1x32x1xf32> to vector<32x1xf32>
    %73 = vector.broadcast %72 : vector<32x1xf32> to vector<32x256xf32>
    %74 = arith.mulf %70, %73 : vector<32x256xf32>
    %75 = arith.addf %65, %74 : vector<32x256xf32>
    %c240_i32 = arith.constant 240 : i32
    %76 = tpu.dynamic_rotate %11 by %c240_i32 dim 1 : vector<32x256xf32>, i32 -> vector<32x256xf32>
    %c7 = arith.constant 7 : index
    %c0_41 = arith.constant 0 : index
    %c0_42 = arith.constant 0 : index
    %77 = vector.load %arg6[%c7, %c0_41, %c0_42] : memref<9x1x256xf32, #tpu.memory_space<vmem>>, vector<1x1x256xf32>
    %78 = vector.shape_cast %77 : vector<1x1x256xf32> to vector<1x256xf32>
    %79 = vector.broadcast %78 : vector<1x256xf32> to vector<32x256xf32>
    %80 = arith.mulf %76, %79 : vector<32x256xf32>
    %c7_43 = arith.constant 7 : index
    %c0_44 = arith.constant 0 : index
    %c0_45 = arith.constant 0 : index
    %81 = vector.load %arg4[%c7_43, %c0_44, %c0_45] : memref<9x32x1xf32, #tpu.memory_space<vmem>>, vector<1x32x1xf32>
    %82 = vector.shape_cast %81 : vector<1x32x1xf32> to vector<32x1xf32>
    %83 = vector.broadcast %82 : vector<32x1xf32> to vector<32x256xf32>
    %84 = arith.mulf %80, %83 : vector<32x256xf32>
    %85 = arith.addf %75, %84 : vector<32x256xf32>
    %c239_i32 = arith.constant 239 : i32
    %86 = tpu.dynamic_rotate %11 by %c239_i32 dim 1 : vector<32x256xf32>, i32 -> vector<32x256xf32>
    %c8 = arith.constant 8 : index
    %c0_46 = arith.constant 0 : index
    %c0_47 = arith.constant 0 : index
    %87 = vector.load %arg6[%c8, %c0_46, %c0_47] : memref<9x1x256xf32, #tpu.memory_space<vmem>>, vector<1x1x256xf32>
    %88 = vector.shape_cast %87 : vector<1x1x256xf32> to vector<1x256xf32>
    %89 = vector.broadcast %88 : vector<1x256xf32> to vector<32x256xf32>
    %90 = arith.mulf %86, %89 : vector<32x256xf32>
    %c8_48 = arith.constant 8 : index
    %c0_49 = arith.constant 0 : index
    %c0_50 = arith.constant 0 : index
    %91 = vector.load %arg4[%c8_48, %c0_49, %c0_50] : memref<9x32x1xf32, #tpu.memory_space<vmem>>, vector<1x32x1xf32>
    %92 = vector.shape_cast %91 : vector<1x32x1xf32> to vector<32x1xf32>
    %93 = vector.broadcast %92 : vector<32x1xf32> to vector<32x256xf32>
    %94 = arith.mulf %90, %93 : vector<32x256xf32>
    %95 = arith.addf %85, %94 : vector<32x256xf32>
    %c0_51 = arith.constant 0 : index
    %c0_52 = arith.constant 0 : index
    %96 = vector.load %arg5[%c0_51, %c0_52] : memref<32x1xf32, #tpu.memory_space<vmem>>, vector<32x1xf32>
    %97 = vector.broadcast %96 : vector<32x1xf32> to vector<32x256xf32>
    %98 = arith.addf %95, %97 : vector<32x256xf32>
    %cst_53 = arith.constant 0.000000e+00 : f32
    %cst_54 = arith.constant 6.000000e+00 : f32
    %99 = vector.broadcast %cst_53 : f32 to vector<32x256xf32>
    %100 = arith.maximumf %99, %98 : vector<32x256xf32>
    %101 = vector.broadcast %cst_54 : f32 to vector<32x256xf32>
    %102 = arith.minimumf %101, %100 : vector<32x256xf32>
    %c0_55 = arith.constant 0 : index
    %c0_56 = arith.constant 0 : index
    %103 = vector.load %arg7[%c0_55, %c0_56] : memref<8x32xbf16, #tpu.memory_space<vmem>>, vector<8x32xbf16>
    %104 = arith.truncf %102 : vector<32x256xf32> to vector<32x256xbf16>
    %cst_57 = arith.constant dense<0.000000e+00> : vector<8x256xf32>
    %105 = tpu.matmul %103, %104, %cst_57 {dimension_numbers = #tpu.dot_dimension_numbers<[1], [0], [0], [1], [0, 0, 1, 1], [], []>} : vector<8x32xbf16>, vector<32x256xbf16>, vector<8x256xf32> -> vector<8x256xf32>
    %c0_58 = arith.constant 0 : index
    %c0_59 = arith.constant 0 : index
    %106 = vector.load %arg8[%c0_58, %c0_59] : memref<8x1xf32, #tpu.memory_space<vmem>>, vector<8x1xf32>
    %107 = vector.broadcast %106 : vector<8x1xf32> to vector<8x256xf32>
    %108 = arith.addf %105, %107 : vector<8x256xf32>
    %109 = arith.addf %108, %1 : vector<8x256xf32>
    %c0_60 = arith.constant 0 : index
    %c0_61 = arith.constant 0 : index
    %c0_62 = arith.constant 0 : index
    %110 = vector.load %arg9[%c0_60, %c0_61, %c0_62] : memref<1x8x256xf32, #tpu.memory_space<vmem>>, vector<1x8x256xf32>
    %111 = vector.shape_cast %110 : vector<1x8x256xf32> to vector<8x256xf32>
    %112 = vector.shape_cast %109 : vector<8x256xf32> to vector<1x8x256xf32>
    tpu.vector_store %arg9[%c0_60, %c0_61, %c0_62], %112 {strides = array<i32>} : memref<1x8x256xf32, #tpu.memory_space<vmem>>, vector<1x8x256xf32>,
    return
  }
  func.func @transform_0(%arg0: i32) -> (i32, i32, i32) {
    %c0_i32 = arith.constant 0 : i32
    %c0_i32_0 = arith.constant 0 : i32
    %c0_i32_1 = arith.constant 0 : i32
    return %arg0, %c0_i32, %c0_i32_0 : i32, i32, i32
  }
  func.func @transform_1(%arg0: i32) -> (i32, i32) {
    %c0_i32 = arith.constant 0 : i32
    %c0_i32_0 = arith.constant 0 : i32
    %c0_i32_1 = arith.constant 0 : i32
    return %c0_i32, %c0_i32_0 : i32, i32
  }
  func.func @transform_2(%arg0: i32) -> (i32, i32) {
    %c0_i32 = arith.constant 0 : i32
    %c0_i32_0 = arith.constant 0 : i32
    %c0_i32_1 = arith.constant 0 : i32
    return %c0_i32, %c0_i32_0 : i32, i32
  }
  func.func @transform_3(%arg0: i32) -> (i32, i32, i32) {
    %c0_i32 = arith.constant 0 : i32
    %c0_i32_0 = arith.constant 0 : i32
    %c0_i32_1 = arith.constant 0 : i32
    %c0_i32_2 = arith.constant 0 : i32
    return %c0_i32, %c0_i32_0, %c0_i32_1 : i32, i32, i32
  }
  func.func @transform_4(%arg0: i32) -> (i32, i32) {
    %c0_i32 = arith.constant 0 : i32
    %c0_i32_0 = arith.constant 0 : i32
    %c0_i32_1 = arith.constant 0 : i32
    return %c0_i32, %c0_i32_0 : i32, i32
  }
  func.func @transform_5(%arg0: i32) -> (i32, i32, i32) {
    %c0_i32 = arith.constant 0 : i32
    %c0_i32_0 = arith.constant 0 : i32
    %c0_i32_1 = arith.constant 0 : i32
    %c0_i32_2 = arith.constant 0 : i32
    return %c0_i32, %c0_i32_0, %c0_i32_1 : i32, i32, i32
  }
  func.func @transform_6(%arg0: i32) -> (i32, i32) {
    %c0_i32 = arith.constant 0 : i32
    %c0_i32_0 = arith.constant 0 : i32
    %c0_i32_1 = arith.constant 0 : i32
    return %c0_i32, %c0_i32_0 : i32, i32
  }
  func.func @transform_7(%arg0: i32) -> (i32, i32) {
    %c0_i32 = arith.constant 0 : i32
    %c0_i32_0 = arith.constant 0 : i32
    %c0_i32_1 = arith.constant 0 : i32
    return %c0_i32, %c0_i32_0 : i32, i32
  }
  func.func @transform_8(%arg0: i32) -> (i32, i32, i32) {
    %c0_i32 = arith.constant 0 : i32
    %c0_i32_0 = arith.constant 0 : i32
    %c0_i32_1 = arith.constant 0 : i32
    return %arg0, %c0_i32, %c0_i32_0 : i32, i32, i32
  }
}

</mosaic_0001>

<llo_original>
// kernel: tpu_custom_call.1
$region0: #{tpu_custom_call.1}
  #allocation0 [shape = 'u32[]', space=smem, size = 0x4, offset = 0x4, fixed_abs, tag = 'smem constant byte address 0x4 - core index']
  #allocation1 [shape = 'u32[144,128]{1,0:T(1,128)}', space=vmem, size = 0x12000, scoped, tag = 'internal scratch']
  %s0 = inlined_call_operand.hbm [shape: f32[2,8,256], index: 0, kind: input, shape index: {}]
  %s1 = inlined_call_operand.hbm [shape: bf16[32,8], index: 1, kind: input, shape index: {}]
  %s2 = inlined_call_operand.hbm [shape: f32[32,1], index: 2, kind: input, shape index: {}]
  %s3 = inlined_call_operand.hbm [shape: f32[9,32,1], index: 3, kind: input, shape index: {}]
  %s4 = inlined_call_operand.hbm [shape: f32[32,1], index: 4, kind: input, shape index: {}]
  %s5 = inlined_call_operand.hbm [shape: f32[9,1,256], index: 5, kind: input, shape index: {}]
  %s6 = inlined_call_operand.hbm [shape: bf16[8,32], index: 6, kind: input, shape index: {}]
  %s7 = inlined_call_operand.hbm [shape: f32[8,1], index: 7, kind: input, shape index: {}]
  %s8 = inlined_call_operand.hbm [shape: f32[2,8,256], index: 8, kind: output, shape index: {}]
  %s9 = sld [smem:[#allocation0]]
  $region97: #{tpu_custom_call.1} parent=0
    _
  %s11 = ssub.s32 1, %s9
  %s12 = scalar_select 0, %s11, %s9
  $region1: #{tpu_custom_call.1} parent=0
    #allocation2 [shape = 'u8[16384]{0}', space=vmem, size = 0x4000, scoped, tag = 'input window, operand 0']
    #allocation3 [shape = 's32[2]{0}', space=sflag, size = 0x8, scoped, tag = 'scoped memory for tpu_custom_call.1']
    #allocation4 [shape = 's32[2]{0}', space=sflag, size = 0x8, scoped, tag = 'scoped memory for tpu_custom_call.1']
    #allocation5 [shape = 'u8[8192]{0}', space=vmem, size = 0x2000, scoped, tag = 'input window, operand 1, single buffered']
    #allocation6 [shape = 's32[1]{0}', space=sflag, size = 0x4, scoped, tag = 'scoped memory for tpu_custom_call.1']
    #allocation7 [shape = 'u8[16384]{0}', space=vmem, size = 0x4000, scoped, tag = 'input window, operand 2, single buffered']
    #allocation8 [shape = 'u8[147456]{0}', space=vmem, size = 0x24000, scoped, tag = 'input window, operand 3, single buffered']
    #allocation9 [shape = 's32[1]{0}', space=sflag, size = 0x4, scoped, tag = 'scoped memory for tpu_custom_call.1']
    #allocation10 [shape = 'u8[16384]{0}', space=vmem, size = 0x4000, scoped, tag = 'input window, operand 4, single buffered']
    #allocation11 [shape = 'u8[9216]{0}', space=vmem, size = 0x2400, scoped, tag = 'input window, operand 5, single buffered']
    #allocation12 [shape = 's32[1]{0}', space=sflag, size = 0x4, scoped, tag = 'scoped memory for tpu_custom_call.1']
    #allocation13 [shape = 'u8[2048]{0}', space=vmem, size = 0x800, scoped, tag = 'input window, operand 6, single buffered']
    #allocation14 [shape = 'u8[4096]{0}', space=vmem, size = 0x1000, scoped, tag = 'input window, operand 7, single buffered']
    #allocation15 [shape = 's32[1]{0}', space=sflag, size = 0x4, scoped, tag = 'scoped memory for tpu_custom_call.1']
    #allocation16 [shape = 'u8[16384]{0}', space=vmem, size = 0x4000, scoped, tag = 'output window, operand 0']
    %13 = vsyncpa [#allocation3], 0
    %s14 = scalar_lea.sflag [#allocation3], 1
    %15 = vsyncpa %s14, 0
    %16 = vsyncpa [#allocation6], 0
    %17 = vsyncpa [#allocation9], 0
    %18 = vsyncpa [#allocation12], 0
    %19 = vsyncpa [#allocation15], 0
    %20 = vsyncpa [#allocation4], 0
    %s21 = scalar_lea.sflag [#allocation4], 1
    %22 = vsyncpa %s21, 0
    loop: start=0, step=1, limit=4
    $region2: #{tpu_custom_call.1} parent=1 // loop_pre_header
      _
    $region3: #{tpu_custom_call.1} parent=1 // loop_header
      %s24 = sphi 0, %s28
      %p25 = scmp.ge.s32.totalorder %s24, 4
      %s34 = sphi 0, %s36
      %s37 = sphi 0, %s34
      %s38 = sphi 0, %s37
      %s54 = sphi 0, %s38
      %s58 = sphi 0, %s58
      %s60 = sphi 0, %s58
      %s61 = sphi 0, %s60
      %s75 = sphi 0, %s61
      %s79 = sphi 0, %s79
      %s81 = sphi 0, %s79
      %s82 = sphi 0, %s81
      %s96 = sphi 0, %s82
      %s100 = sphi 0, %s100
      %s102 = sphi 0, %s100
      %s103 = sphi 0, %s102
      %s117 = sphi 0, %s103
      %s121 = sphi 0, %s121
      %s123 = sphi 0, %s121
      %s124 = sphi 0, %s123
      %s138 = sphi 0, %s124
      %s142 = sphi 0, %s142
      %s144 = sphi 0, %s142
      %s145 = sphi 0, %s144
      %s159 = sphi 0, %s145
      %s163 = sphi 0, %s163
      %s165 = sphi 0, %s163
      %s166 = sphi 0, %s165
      %s180 = sphi 0, %s166
      %s184 = sphi 0, %s184
      %s186 = sphi 0, %s184
      %s187 = sphi 0, %s186
      %s201 = sphi 0, %s187
      %s207 = sphi 0, %s209
      %s210 = sphi 0, %s207
      %s211 = sphi 0, %s210
      %s227 = sphi 0, %s211
    $region4: #{tpu_custom_call.1} parent=1 // loop_header_branch
      %27 = sbr.rel (%p25) target = $region8
    $region5: #{tpu_custom_call.1} parent=1 // loop_body
      %s29 = ssub.s32 %s24, 1
      %s30 = ssub.s32 %s24, 2
      %s31 = sadd.s32 %s24, 1
      %s32 = ssub.s32 %s24, %s31
      %p33 = scmp.eq.s32.totalorder %s32, 0
      %s35 = sadd.s32 %s34, 1
      %s36 = scalar_select %p33, %s34, %s35
      %p39 = pneg %p33
      %p40 = scmp.eq.s32.totalorder %s24, 1
      %p41 = por %p39, %p40
      %p42 = scmp.ne.s32.totalorder %s34, %s37
      %p43 = scmp.eq.s32.totalorder %s24, 0
      %p44 = por %p42, %p43
      %p45 = scmp.ne.s32.totalorder %s34, %s37
      %p46 = scmp.eq.s32.totalorder %s29, 1
      %p47 = por %p45, %p46
      %p48 = scmp.ne.s32.totalorder %s37, %s38
      %p49 = scmp.eq.s32.totalorder %s29, 0
      %p50 = por %p48, %p49
      %p51 = scmp.ne.s32.totalorder %s37, %s38
      %p52 = scmp.eq.s32.totalorder %s30, 1
      %p53 = por %p51, %p52
      %p55 = scmp.ne.s32.totalorder %s38, %s54
      %p56 = scmp.eq.s32.totalorder %s30, 0
      %p57 = por %p55, %p56
      %s59 = sadd.s32 %s58, 1
      %p62 = scmp.eq.s32.totalorder %s24, 1
      %p63 = scmp.ne.s32.totalorder %s58, %s60
      %p64 = scmp.eq.s32.totalorder %s24, 0
      %p65 = por %p63, %p64
      %p66 = scmp.ne.s32.totalorder %s58, %s60
      %p67 = scmp.eq.s32.totalorder %s29, 1
      %p68 = por %p66, %p67
      %p69 = scmp.ne.s32.totalorder %s60, %s61
      %p70 = scmp.eq.s32.totalorder %s29, 0
      %p71 = por %p69, %p70
      %p72 = scmp.ne.s32.totalorder %s60, %s61
      %p73 = scmp.eq.s32.totalorder %s30, 1
      %p74 = por %p72, %p73
      %p76 = scmp.ne.s32.totalorder %s61, %s75
      %p77 = scmp.eq.s32.totalorder %s30, 0
      %p78 = por %p76, %p77
      %s80 = sadd.s32 %s79, 1
      %p83 = scmp.eq.s32.totalorder %s24, 1
      %p84 = scmp.ne.s32.totalorder %s79, %s81
      %p85 = scmp.eq.s32.totalorder %s24, 0
      %p86 = por %p84, %p85
      %p87 = scmp.ne.s32.totalorder %s79, %s81
      %p88 = scmp.eq.s32.totalorder %s29, 1
      %p89 = por %p87, %p88
      %p90 = scmp.ne.s32.totalorder %s81, %s82
      %p91 = scmp.eq.s32.totalorder %s29, 0
      %p92 = por %p90, %p91
      %p93 = scmp.ne.s32.totalorder %s81, %s82
      %p94 = scmp.eq.s32.totalorder %s30, 1
      %p95 = por %p93, %p94
      %p97 = scmp.ne.s32.totalorder %s82, %s96
      %p98 = scmp.eq.s32.totalorder %s30, 0
      %p99 = por %p97, %p98
      %s101 = sadd.s32 %s100, 1
      %p104 = scmp.eq.s32.totalorder %s24, 1
      %p105 = scmp.ne.s32.totalorder %s100, %s102
      %p106 = scmp.eq.s32.totalorder %s24, 0
      %p107 = por %p105, %p106
      %p108 = scmp.ne.s32.totalorder %s100, %s102
      %p109 = scmp.eq.s32.totalorder %s29, 1
      %p110 = por %p108, %p109
      %p111 = scmp.ne.s32.totalorder %s102, %s103
      %p112 = scmp.eq.s32.totalorder %s29, 0
      %p113 = por %p111, %p112
      %p114 = scmp.ne.s32.totalorder %s102, %s103
      %p115 = scmp.eq.s32.totalorder %s30, 1
      %p116 = por %p114, %p115
      %p118 = scmp.ne.s32.totalorder %s103, %s117
      %p119 = scmp.eq.s32.totalorder %s30, 0
      %p120 = por %p118, %p119
      %s122 = sadd.s32 %s121, 1
      %p125 = scmp.eq.s32.totalorder %s24, 1
      %p126 = scmp.ne.s32.totalorder %s121, %s123
      %p127 = scmp.eq.s32.totalorder %s24, 0
      %p128 = por %p126, %p127
      %p129 = scmp.ne.s32.totalorder %s121, %s123
      %p130 = scmp.eq.s32.totalorder %s29, 1
      %p131 = por %p129, %p130
      %p132 = scmp.ne.s32.totalorder %s123, %s124
      %p133 = scmp.eq.s32.totalorder %s29, 0
      %p134 = por %p132, %p133
      %p135 = scmp.ne.s32.totalorder %s123, %s124
      %p136 = scmp.eq.s32.totalorder %s30, 1
      %p137 = por %p135, %p136
      %p139 = scmp.ne.s32.totalorder %s124, %s138
      %p140 = scmp.eq.s32.totalorder %s30, 0
      %p141 = por %p139, %p140
      %s143 = sadd.s32 %s142, 1
      %p146 = scmp.eq.s32.totalorder %s24, 1
      %p147 = scmp.ne.s32.totalorder %s142, %s144
      %p148 = scmp.eq.s32.totalorder %s24, 0
      %p149 = por %p147, %p148
      %p150 = scmp.ne.s32.totalorder %s142, %s144
      %p151 = scmp.eq.s32.totalorder %s29, 1
      %p152 = por %p150, %p151
      %p153 = scmp.ne.s32.totalorder %s144, %s145
      %p154 = scmp.eq.s32.totalorder %s29, 0
      %p155 = por %p153, %p154
      %p156 = scmp.ne.s32.totalorder %s144, %s145
      %p157 = scmp.eq.s32.totalorder %s30, 1
      %p158 = por %p156, %p157
      %p160 = scmp.ne.s32.totalorder %s145, %s159
      %p161 = scmp.eq.s32.totalorder %s30, 0
      %p162 = por %p160, %p161
      %s164 = sadd.s32 %s163, 1
      %p167 = scmp.eq.s32.totalorder %s24, 1
      %p168 = scmp.ne.s32.totalorder %s163, %s165
      %p169 = scmp.eq.s32.totalorder %s24, 0
      %p170 = por %p168, %p169
      %p171 = scmp.ne.s32.totalorder %s163, %s165
      %p172 = scmp.eq.s32.totalorder %s29, 1
      %p173 = por %p171, %p172
      %p174 = scmp.ne.s32.totalorder %s165, %s166
      %p175 = scmp.eq.s32.totalorder %s29, 0
      %p176 = por %p174, %p175
      %p177 = scmp.ne.s32.totalorder %s165, %s166
      %p178 = scmp.eq.s32.totalorder %s30, 1
      %p179 = por %p177, %p178
      %p181 = scmp.ne.s32.totalorder %s166, %s180
      %p182 = scmp.eq.s32.totalorder %s30, 0
      %p183 = por %p181, %p182
      %s185 = sadd.s32 %s184, 1
      %p188 = scmp.eq.s32.totalorder %s24, 1
      %p189 = scmp.ne.s32.totalorder %s184, %s186
      %p190 = scmp.eq.s32.totalorder %s24, 0
      %p191 = por %p189, %p190
      %p192 = scmp.ne.s32.totalorder %s184, %s186
      %p193 = scmp.eq.s32.totalorder %s29, 1
      %p194 = por %p192, %p193
      %p195 = scmp.ne.s32.totalorder %s186, %s187
      %p196 = scmp.eq.s32.totalorder %s29, 0
      %p197 = por %p195, %p196
      %p198 = scmp.ne.s32.totalorder %s186, %s187
      %p199 = scmp.eq.s32.totalorder %s30, 1
      %p200 = por %p198, %p199
      %p202 = scmp.ne.s32.totalorder %s187, %s201
      %p203 = scmp.eq.s32.totalorder %s30, 0
      %p204 = por %p202, %p203
      %s205 = ssub.s32 %s24, %s31
      %p206 = scmp.eq.s32.totalorder %s205, 0
      %s208 = sadd.s32 %s207, 1
      %s209 = scalar_select %p206, %s207, %s208
      %p212 = pneg %p206
      %p213 = scmp.eq.s32.totalorder %s24, 1
      %p214 = por %p212, %p213
      %p215 = scmp.ne.s32.totalorder %s207, %s210
      %p216 = scmp.eq.s32.totalorder %s24, 0
      %p217 = por %p215, %p216
      %p218 = scmp.ne.s32.totalorder %s207, %s210
      %p219 = scmp.eq.s32.totalorder %s29, 1
      %p220 = por %p218, %p219
      %p221 = scmp.ne.s32.totalorder %s210, %s211
      %p222 = scmp.eq.s32.totalorder %s29, 0
      %p223 = por %p221, %p222
      %p224 = scmp.ne.s32.totalorder %s210, %s211
      %p225 = scmp.eq.s32.totalorder %s30, 1
      %p226 = por %p224, %p225
      %p228 = scmp.ne.s32.totalorder %s211, %s227
      %p229 = scmp.eq.s32.totalorder %s30, 0
      %p230 = por %p228, %p229
      %p231 = scmp.le.s32.totalorder 1, %s24
      %p232 = scmp.lt.s32.totalorder %s24, 3
      %p233 = pnand %p231, %p232
      %p234 = pneg %p233
      // Predicated region
      $region9: #{tpu_custom_call.1} parent=5 // pred_check
        _
      $region10: #{tpu_custom_call.1} parent=5 // pred_check_branch
        %236 = sbr.rel (%p233) target = $region12
      $region11: #{tpu_custom_call.1} parent=5 // pred_region
        %s237 = ssub.s32 %s24, 1
        // Predicated region
        $region13: #{tpu_custom_call.1} parent=11 // pred_check
          %p238 = pneg %p71
        $region14: #{tpu_custom_call.1} parent=11 // pred_check_branch
          %240 = sbr.rel (%p238) target = $region16
        $region15: #{tpu_custom_call.1} parent=11 // pred_region
          %s242 = ssub.s32 256, 256
          %243 = vsyncadd [#allocation6], %s242
          %s244 = sshll.u32 [#allocation5], 4
          %s245 = int_to_ptr.vmem [resolvable:$true] %s244
          %250 = dma.hbm_to_vmem [thread:$0]  %s1, 256, %s245, [#allocation6], 64, 64, 4
        $region16: #{tpu_custom_call.1} parent=11 // pred_fallthru
          _
        // Predicated region
        $region17: #{tpu_custom_call.1} parent=11 // pred_check
          %p251 = pneg %p92
        $region18: #{tpu_custom_call.1} parent=11 // pred_check_branch
          %253 = sbr.rel (%p251) target = $region20
        $region19: #{tpu_custom_call.1} parent=11 // pred_region
          %s255 = ssub.s32 512, 512
          %256 = vsyncadd [#allocation6], %s255
          %s257 = sshll.u32 [#allocation7], 4
          %s258 = int_to_ptr.vmem [resolvable:$true] %s257
          %263 = dma.hbm_to_vmem [thread:$0]  %s2, 512, %s258, [#allocation6], 128, 128, 8
        $region20: #{tpu_custom_call.1} parent=11 // pred_fallthru
          _
        // Predicated region
        $region21: #{tpu_custom_call.1} parent=11 // pred_check
          %p264 = pneg %p113
        $region22: #{tpu_custom_call.1} parent=11 // pred_check_branch
          %266 = sbr.rel (%p264) target = $region24
        $region23: #{tpu_custom_call.1} parent=11 // pred_region
          %s268 = ssub.s32 4608, 4608
          %269 = vsyncadd [#allocation9], %s268
          %s270 = sshll.u32 [#allocation8], 4
          %s271 = int_to_ptr.vmem [resolvable:$true] %s270
          %276 = dma.hbm_to_vmem [thread:$0]  %s3, 4608, %s271, [#allocation9], 128, 128, 8
        $region24: #{tpu_custom_call.1} parent=11 // pred_fallthru
          _
        // Predicated region
        $region25: #{tpu_custom_call.1} parent=11 // pred_check
          %p277 = pneg %p134
        $region26: #{tpu_custom_call.1} parent=11 // pred_check_branch
          %279 = sbr.rel (%p277) target = $region28
        $region27: #{tpu_custom_call.1} parent=11 // pred_region
          %s281 = ssub.s32 512, 512
          %282 = vsyncadd [#allocation9], %s281
          %s283 = sshll.u32 [#allocation10], 4
          %s284 = int_to_ptr.vmem [resolvable:$true] %s283
          %289 = dma.hbm_to_vmem [thread:$0]  %s4, 512, %s284, [#allocation9], 128, 128, 8
        $region28: #{tpu_custom_call.1} parent=11 // pred_fallthru
          _
        // Predicated region
        $region29: #{tpu_custom_call.1} parent=11 // pred_check
          %p290 = pneg %p155
        $region30: #{tpu_custom_call.1} parent=11 // pred_check_branch
          %292 = sbr.rel (%p290) target = $region32
        $region31: #{tpu_custom_call.1} parent=11 // pred_region
          %s294 = ssub.s32 288, 288
          %295 = vsyncadd [#allocation12], %s294
          %s296 = sshll.u32 [#allocation11], 4
          %s297 = int_to_ptr.vmem [resolvable:$true] %s296
          %302 = dma.hbm_to_vmem [thread:$0]  %s5, 288, %s297, [#allocation12], 32, 32, 2
        $region32: #{tpu_custom_call.1} parent=11 // pred_fallthru
          _
        // Predicated region
        $region33: #{tpu_custom_call.1} parent=11 // pred_check
          %p303 = pneg %p176
        $region34: #{tpu_custom_call.1} parent=11 // pred_check_branch
          %305 = sbr.rel (%p303) target = $region36
        $region35: #{tpu_custom_call.1} parent=11 // pred_region
          %s307 = ssub.s32 64, 64
          %308 = vsyncadd [#allocation12], %s307
          %s310 = sshll.u32 [#allocation13], 4
          %s311 = int_to_ptr.vmem [resolvable:$true] %s310
          %313 = dma.hbm_to_vmem [thread:$0]  %s6, 64, %s311, [#allocation12]
        $region36: #{tpu_custom_call.1} parent=11 // pred_fallthru
          _
        // Predicated region
        $region37: #{tpu_custom_call.1} parent=11 // pred_check
          %p314 = pneg %p197
        $region38: #{tpu_custom_call.1} parent=11 // pred_check_branch
          %316 = sbr.rel (%p314) target = $region40
        $region39: #{tpu_custom_call.1} parent=11 // pred_region
          %s318 = ssub.s32 128, 128
          %319 = vsyncadd [#allocation15], %s318
          %s321 = sshll.u32 [#allocation14], 4
          %s322 = int_to_ptr.vmem [resolvable:$true] %s321
          %324 = dma.hbm_to_vmem [thread:$0]  %s7, 128, %s322, [#allocation15]
        $region40: #{tpu_custom_call.1} parent=11 // pred_fallthru
          _
      $region12: #{tpu_custom_call.1} parent=5 // pred_fallthru
        _
      %p325 = scmp.lt.s32.totalorder %s24, 2
      // Predicated region
      $region41: #{tpu_custom_call.1} parent=5 // pred_check
        %p326 = pneg %p325
      $region42: #{tpu_custom_call.1} parent=5 // pred_check_branch
        %328 = sbr.rel (%p326) target = $region44
      $region43: #{tpu_custom_call.1} parent=5 // pred_region
        // Predicated region
        $region45: #{tpu_custom_call.1} parent=43 // pred_check
          %p329 = pneg %p44
        $region46: #{tpu_custom_call.1} parent=43 // pred_check_branch
          %331 = sbr.rel (%p329) target = $region48
        $region47: #{tpu_custom_call.1} parent=43 // pred_region
          %s332 = sand.u32 %s34, 1
          %s333 = scalar_lea.sflag [#allocation3], %s332
          %s334 = sand.u32 %s34, 1
          %s335 = smul.addr %s334, 16
          %s336 = scalar_lea.vmem [#allocation2], %s335
          %s338 = ssub.s32 256, 256
          %339 = vsyncadd %s333, %s338
          %s340 = smul.addr %s24, 2
          %s341 = smul.addr %s340, 128
          %s342 = scalar_lea.hbm %s0, %s341
          %s344 = sshll.u32 %s336, 4
          %s345 = int_to_ptr.vmem [resolvable:$true] %s344
          %347 = dma.hbm_to_vmem [thread:$0]  %s342, 256, %s345, %s333
        $region48: #{tpu_custom_call.1} parent=43 // pred_fallthru
          _
      $region44: #{tpu_custom_call.1} parent=5 // pred_fallthru
        _
      %p348 = scmp.le.s32.totalorder 1, %s24
      %p349 = scmp.lt.s32.totalorder %s24, 3
      %p350 = pnand %p348, %p349
      %p351 = pneg %p350
      // Predicated region
      $region49: #{tpu_custom_call.1} parent=5 // pred_check
        _
      $region50: #{tpu_custom_call.1} parent=5 // pred_check_branch
        %353 = sbr.rel (%p350) target = $region52
      $region51: #{tpu_custom_call.1} parent=5 // pred_region
        %s354 = ssub.s32 %s24, 1
        %s355 = sand.u32 %s37, 1
        %s356 = scalar_lea.sflag [#allocation3], %s355
        %s357 = sand.u32 %s37, 1
        %s358 = smul.addr %s357, 16
        %s359 = scalar_lea.vmem [#allocation2], %s358
        // Predicated region
        $region53: #{tpu_custom_call.1} parent=51 // pred_check
          %p360 = pneg %p50
        $region54: #{tpu_custom_call.1} parent=51 // pred_check_branch
          %362 = sbr.rel (%p360) target = $region56
        $region55: #{tpu_custom_call.1} parent=51 // pred_region
          %363 = dma.done %s356, 256
        $region56: #{tpu_custom_call.1} parent=51 // pred_fallthru
          _
        // Predicated region
        $region57: #{tpu_custom_call.1} parent=51 // pred_check
          %p364 = pneg %p71
        $region58: #{tpu_custom_call.1} parent=51 // pred_check_branch
          %366 = sbr.rel (%p364) target = $region60
        $region59: #{tpu_custom_call.1} parent=51 // pred_region
          %367 = dma.done [#allocation6], 256
        $region60: #{tpu_custom_call.1} parent=51 // pred_fallthru
          _
        // Predicated region
        $region61: #{tpu_custom_call.1} parent=51 // pred_check
          %p368 = pneg %p92
        $region62: #{tpu_custom_call.1} parent=51 // pred_check_branch
          %370 = sbr.rel (%p368) target = $region64
        $region63: #{tpu_custom_call.1} parent=51 // pred_region
          %371 = dma.done [#allocation6], 512
        $region64: #{tpu_custom_call.1} parent=51 // pred_fallthru
          _
        // Predicated region
        $region65: #{tpu_custom_call.1} parent=51 // pred_check
          %p372 = pneg %p113
        $region66: #{tpu_custom_call.1} parent=51 // pred_check_branch
          %374 = sbr.rel (%p372) target = $region68
        $region67: #{tpu_custom_call.1} parent=51 // pred_region
          %375 = dma.done [#allocation9], 4608
        $region68: #{tpu_custom_call.1} parent=51 // pred_fallthru
          _
        // Predicated region
        $region69: #{tpu_custom_call.1} parent=51 // pred_check
          %p376 = pneg %p134
        $region70: #{tpu_custom_call.1} parent=51 // pred_check_branch
          %378 = sbr.rel (%p376) target = $region72
        $region71: #{tpu_custom_call.1} parent=51 // pred_region
          %379 = dma.done [#allocation9], 512
        $region72: #{tpu_custom_call.1} parent=51 // pred_fallthru
          _
        // Predicated region
        $region73: #{tpu_custom_call.1} parent=51 // pred_check
          %p380 = pneg %p155
        $region74: #{tpu_custom_call.1} parent=51 // pred_check_branch
          %382 = sbr.rel (%p380) target = $region76
        $region75: #{tpu_custom_call.1} parent=51 // pred_region
          %383 = dma.done [#allocation12], 288
        $region76: #{tpu_custom_call.1} parent=51 // pred_fallthru
          _
        // Predicated region
        $region77: #{tpu_custom_call.1} parent=51 // pred_check
          %p384 = pneg %p176
        $region78: #{tpu_custom_call.1} parent=51 // pred_check_branch
          %386 = sbr.rel (%p384) target = $region80
        $region79: #{tpu_custom_call.1} parent=51 // pred_region
          %387 = dma.done [#allocation12], 64
        $region80: #{tpu_custom_call.1} parent=51 // pred_fallthru
          _
        // Predicated region
        $region81: #{tpu_custom_call.1} parent=51 // pred_check
          %p388 = pneg %p197
        $region82: #{tpu_custom_call.1} parent=51 // pred_check_branch
          %390 = sbr.rel (%p388) target = $region84
        $region83: #{tpu_custom_call.1} parent=51 // pred_region
          %391 = dma.done [#allocation15], 128
        $region84: #{tpu_custom_call.1} parent=51 // pred_fallthru
          _
        %s392 = sand.u32 %s37, 1
        %s393 = scalar_lea.sflag [#allocation3], %s392
        %s394 = sand.u32 %s37, 1
        %s395 = smul.addr %s394, 16
        %s396 = scalar_lea.vmem [#allocation2], %s395
        %p397 = pneg %p50
        %p398 = pneg %p47
        %p399 = pneg %p71
        %p400 = pneg %p68
        %p401 = pneg %p92
        %p402 = pneg %p89
        %p403 = pneg %p113
        %p404 = pneg %p110
        %p405 = pneg %p134
        %p406 = pneg %p131
        %p407 = pneg %p155
        %p408 = pneg %p152
        %p409 = pneg %p176
        %p410 = pneg %p173
        %p411 = pneg %p197
        %p412 = pneg %p194
        %p413 = pneg %p223
        %p414 = pneg %p220
        %s415 = sand.u32 %s210, 1
        %s416 = scalar_lea.sflag [#allocation4], %s415
        %s417 = sand.u32 %s210, 1
        %s418 = smul.addr %s417, 16
        %s419 = scalar_lea.vmem [#allocation16], %s418
        %v421 = vld [vmem:[%s359] sm:$0xff]
        %v422 = vld [vmem:[%s359 + $0x8] sm:$0xff]
        %v423 = vld [vmem:[#allocation5] sm:$0xf]
        %v424 = vld [vmem:[#allocation5 + $0x4] sm:$0xf]
        %v425 = vld [vmem:[#allocation5 + $0x8] sm:$0xf]
        %v426 = vld [vmem:[#allocation5 + $0xc] sm:$0xf]
        %v427 = vpack.c.bf16 %v421, %v421
        %v428 = vpack.c.bf16 %v422, %v422
        %v429 = vld [vmem:[#allocation7] sm:$0xff]
        %v430 = vld [vmem:[#allocation7 + $0x8] sm:$0xff]
        %v431 = vld [vmem:[#allocation7 + $0x10] sm:$0xff]
        %v432 = vld [vmem:[#allocation7 + $0x18] sm:$0xff]
        %434 = vset.pattern.permute.xlu0 0
        %435 = vperm.xlu0 %434, %v429
        %v436 = vpop.permute.xlu0 %435
        %439 = vset.pattern.permute.xlu0 0
        %440 = vperm.xlu0 %439, %v430
        %v441 = vpop.permute.xlu0 %440
        %444 = vset.pattern.permute.xlu0 0
        %445 = vperm.xlu0 %444, %v431
        %v446 = vpop.permute.xlu0 %445
        %449 = vset.pattern.permute.xlu0 0
        %450 = vperm.xlu0 %449, %v432
        %v451 = vpop.permute.xlu0 %450
        %v457 = vunpack.c.l.b16 %v423
        %v458 = vunpack.c.l.b16 %v424
        %v459 = vunpack.c.l.b16 %v425
        %v460 = vunpack.c.l.b16 %v426
        %v461 = vpack.c.b16 %v458, %v457
        %v462 = vpack.c.b16 %v460, %v459
        %vm463 = vcmask 64512
        %v465 = vsel %vm463, %v461, 0
        %v468 = vsel %vm463, %v462, 0
        %vm470 = vcmask 1043456
        %v472 = vsel %vm470, %v427, 0
        %v475 = vsel %vm470, %v428, 0
        %477 = vmatprep.subr.bf16.mxu0 %v475
        %478 = vmatpush1.bf16.msra.mxu0 %v472
        %479 = vmatprep.subr.bf16.mxu0 0
        %480 = vmatpush1.bf16.msra.mxu0 0
        %481 = vmatprep.subr.bf16.mxu0 0
        %482 = vmatpush1.bf16.msra.mxu0 0
        %483 = vmatprep.subr.bf16.mxu0 0
        %484 = vmatpush1.bf16.msra.mxu0 0
        %485 = vmatprep.subr.bf16.mxu0 0
        %486 = vmatpush1.bf16.msra.mxu0 0
        %487 = vmatprep.subr.bf16.mxu0 0
        %488 = vmatpush1.bf16.msra.mxu0 0
        %489 = vmatprep.subr.bf16.mxu0 0
        %490 = vmatpush1.bf16.msra.mxu0 0
        %491 = vmatprep.subr.bf16.mxu0 0
        %492 = vmatpush1.bf16.msra.mxu0 0
        %493 = vmatprep.subr.bf16.mxu0 0
        %494 = vmatpush1.bf16.msra.mxu0 0
        %495 = vmatprep.subr.bf16.mxu0 0
        %496 = vmatpush1.bf16.msra.mxu0 0
        %497 = vmatprep.subr.bf16.mxu0 0
        %498 = vmatpush1.bf16.msra.mxu0 0
        %499 = vmatprep.subr.bf16.mxu0 0
        %500 = vmatpush1.bf16.msra.mxu0 0
        %501 = vmatprep.subr.bf16.mxu0 0
        %502 = vmatpush1.bf16.msra.mxu0 0
        %503 = vmatprep.subr.bf16.mxu0 0
        %504 = vmatpush1.bf16.msra.mxu0 0
        %505 = vmatprep.subr.bf16.mxu0 0
        %506 = vmatpush1.bf16.msra.mxu0 0
        %507 = vmatprep.subr.bf16.mxu0 0
        %508 = vmatpush1.bf16.msra.mxu0 0
        %509 = vmatprep.mubr.bf16.mxu0 0
        %510 = vmatmul.mubr.bf16.gmra.mrb[0].mxu0 %v465
        %v511 = vpop.f32.mrb[0].mxu0
        %v512 = vadd.f32 %v436, %v511
        %v513 = vpop.f32.mrb[0].mxu0
        %v514 = vadd.f32 %v436, %v513
        %v515 = vpop.f32.mrb[0].mxu0
        %v516 = vadd.f32 %v441, %v515
        %v517 = vpop.f32.mrb[0].mxu0
        %v518 = vadd.f32 %v441, %v517
        %519 = vmatprep.mubr.bf16.mxu0 0
        %520 = vmatmul.mubr.bf16.gmra.mrb[0].mxu0 %v468
        %v521 = vpop.f32.mrb[0].mxu0
        %v522 = vadd.f32 %v446, %v521
        %v523 = vpop.f32.mrb[0].mxu0
        %v524 = vadd.f32 %v446, %v523
        %v525 = vpop.f32.mrb[0].mxu0
        %v526 = vadd.f32 %v451, %v525
        %v527 = vpop.f32.mrb[0].mxu0
        %v528 = vadd.f32 %v451, %v527
        %529 = vdwg.mxu0
        %v530 = vmax.f32 %v512, 0.0
        %v531 = vmax.f32 %v514, 0.0
        %v532 = vmax.f32 %v516, 0.0
        %v533 = vmax.f32 %v518, 0.0
        %v534 = vmax.f32 %v522, 0.0
        %v535 = vmax.f32 %v524, 0.0
        %v536 = vmax.f32 %v526, 0.0
        %v537 = vmax.f32 %v528, 0.0
        %v538 = vmin.f32 %v530, 6.0
        %v539 = vmin.f32 %v531, 6.0
        %v540 = vmin.f32 %v532, 6.0
        %v541 = vmin.f32 %v533, 6.0
        %v542 = vmin.f32 %v534, 6.0
        %v543 = vmin.f32 %v535, 6.0
        %v544 = vmin.f32 %v536, 6.0
        %v545 = vmin.f32 %v537, 6.0
        %s546 = scalar_lea.vmem [#allocation8], 128
        %v547 = vld [vmem:[%s546] sm:$0xff]
        %v548 = vld [vmem:[%s546 + $0x8] sm:$0xff]
        %v549 = vld [vmem:[%s546 + $0x10] sm:$0xff]
        %v550 = vld [vmem:[%s546 + $0x18] sm:$0xff]
        %552 = vset.pattern.permute.xlu0 0
        %553 = vperm.xlu0 %552, %v547
        %v554 = vpop.permute.xlu0 %553
        %557 = vset.pattern.permute.xlu0 0
        %558 = vperm.xlu0 %557, %v548
        %v559 = vpop.permute.xlu0 %558
        %562 = vset.pattern.permute.xlu0 0
        %563 = vperm.xlu0 %562, %v549
        %v564 = vpop.permute.xlu0 %563
        %567 = vset.pattern.permute.xlu0 0
        %568 = vperm.xlu0 %567, %v550
        %v569 = vpop.permute.xlu0 %568
        %v571 = vmul.f32 %v538, %v554
        %v572 = vmul.f32 %v539, %v554
        %v573 = vmul.f32 %v540, %v559
        %v574 = vmul.f32 %v541, %v559
        %v575 = vmul.f32 %v542, %v564
        %v576 = vmul.f32 %v543, %v564
        %v577 = vmul.f32 %v544, %v569
        %v578 = vmul.f32 %v545, %v569
        %579 = vrot.lane.b32.xlu0 %v538, 17
        %v580 = vpop.permute.xlu0 %579
        %581 = vrot.lane.b32.xlu0 %v540, 17
        %v582 = vpop.permute.xlu0 %581
        %583 = vrot.lane.b32.xlu0 %v542, 17
        %v584 = vpop.permute.xlu0 %583
        %585 = vrot.lane.b32.xlu0 %v544, 17
        %v586 = vpop.permute.xlu0 %585
        %587 = vrot.lane.b32.xlu0 %v539, 17
        %v588 = vpop.permute.xlu0 %587
        %589 = vrot.lane.b32.xlu0 %v541, 17
        %v590 = vpop.permute.xlu0 %589
        %591 = vrot.lane.b32.xlu0 %v543, 17
        %v592 = vpop.permute.xlu0 %591
        %593 = vrot.lane.b32.xlu0 %v545, 17
        %v594 = vpop.permute.xlu0 %593
        %v595 = vlaneseq
        %v596 = vand.u32 %v595, 127
        %vm597 = vcmp.lt.s32.totalorder %v596, 17
        %v598 = vsel %vm597, %v580, %v588
        %v599 = vsel %vm597, %v582, %v590
        %v600 = vsel %vm597, %v584, %v592
        %v601 = vsel %vm597, %v586, %v594
        %v602 = vsel %vm597, %v588, %v580
        %v603 = vsel %vm597, %v590, %v582
        %v604 = vsel %vm597, %v592, %v584
        %v605 = vsel %vm597, %v594, %v586
        %v606 = vld [vmem:[#allocation11] sm:$0x3]
        %v608 = vlaneseq
        %v609 = vshrl.u32 %v608, 7
        %v610 = vsub.s32 0, %v609
        %v611 = vrot.slane %v606, %v610
        %v612 = vlaneseq
        %v613 = vshrl.u32 %v612, 7
        %v614 = vsub.s32 1, %v613
        %v615 = vrot.slane %v606, %v614
        %v618 = vmul.f32 %v602, %v611
        %v619 = vmul.f32 %v598, %v615
        %v620 = vmul.f32 %v603, %v611
        %v621 = vmul.f32 %v599, %v615
        %v622 = vmul.f32 %v604, %v611
        %v623 = vmul.f32 %v600, %v615
        %v624 = vmul.f32 %v605, %v611
        %v625 = vmul.f32 %v601, %v615
        %v626 = vld [vmem:[#allocation8] sm:$0xff]
        %v627 = vld [vmem:[#allocation8 + $0x8] sm:$0xff]
        %v628 = vld [vmem:[#allocation8 + $0x10] sm:$0xff]
        %v629 = vld [vmem:[#allocation8 + $0x18] sm:$0xff]
        %631 = vset.pattern.permute.xlu0 0
        %632 = vperm.xlu0 %631, %v626
        %v633 = vpop.permute.xlu0 %632
        %636 = vset.pattern.permute.xlu0 0
        %637 = vperm.xlu0 %636, %v627
        %v638 = vpop.permute.xlu0 %637
        %641 = vset.pattern.permute.xlu0 0
        %642 = vperm.xlu0 %641, %v628
        %v643 = vpop.permute.xlu0 %642
        %646 = vset.pattern.permute.xlu0 0
        %647 = vperm.xlu0 %646, %v629
        %v648 = vpop.permute.xlu0 %647
        %v650 = vmul.f32 %v618, %v633
        %v651 = vmul.f32 %v619, %v633
        %v652 = vmul.f32 %v620, %v638
        %v653 = vmul.f32 %v621, %v638
        %v654 = vmul.f32 %v622, %v643
        %v655 = vmul.f32 %v623, %v643
        %v656 = vmul.f32 %v624, %v648
        %v657 = vmul.f32 %v625, %v648
        %v658 = vadd.f32 %v571, %v650
        %v659 = vadd.f32 %v572, %v651
        %v660 = vadd.f32 %v573, %v652
        %v661 = vadd.f32 %v574, %v653
        %v662 = vadd.f32 %v575, %v654
        %v663 = vadd.f32 %v576, %v655
        %v664 = vadd.f32 %v577, %v656
        %v665 = vadd.f32 %v578, %v657
        %666 = vrot.lane.b32.xlu0 %v538, 16
        %v667 = vpop.permute.xlu0 %666
        %668 = vrot.lane.b32.xlu0 %v540, 16
        %v669 = vpop.permute.xlu0 %668
        %670 = vrot.lane.b32.xlu0 %v542, 16
        %v671 = vpop.permute.xlu0 %670
        %672 = vrot.lane.b32.xlu0 %v544, 16
        %v673 = vpop.permute.xlu0 %672
        %674 = vrot.lane.b32.xlu0 %v539, 16
        %v675 = vpop.permute.xlu0 %674
        %676 = vrot.lane.b32.xlu0 %v541, 16
        %v677 = vpop.permute.xlu0 %676
        %678 = vrot.lane.b32.xlu0 %v543, 16
        %v679 = vpop.permute.xlu0 %678
        %680 = vrot.lane.b32.xlu0 %v545, 16
        %v681 = vpop.permute.xlu0 %680
        %vm682 = vcmp.lt.s32.totalorder %v596, 16
        %v683 = vsel %vm682, %v667, %v675
        %v684 = vsel %vm682, %v669, %v677
        %v685 = vsel %vm682, %v671, %v679
        %v686 = vsel %vm682, %v673, %v681
        %v687 = vsel %vm682, %v675, %v667
        %v688 = vsel %vm682, %v677, %v669
        %v689 = vsel %vm682, %v679, %v671
        %v690 = vsel %vm682, %v681, %v673
        %s691 = scalar_lea.vmem [#allocation11], 2
        %v692 = vld [vmem:[%s691] sm:$0x3]
        %v694 = vlaneseq
        %v695 = vshrl.u32 %v694, 7
        %v696 = vsub.s32 0, %v695
        %v697 = vrot.slane %v692, %v696
        %v698 = vlaneseq
        %v699 = vshrl.u32 %v698, 7
        %v700 = vsub.s32 1, %v699
        %v701 = vrot.slane %v692, %v700
        %v704 = vmul.f32 %v687, %v697
        %v705 = vmul.f32 %v683, %v701
        %v706 = vmul.f32 %v688, %v697
        %v707 = vmul.f32 %v684, %v701
        %v708 = vmul.f32 %v689, %v697
        %v709 = vmul.f32 %v685, %v701
        %v710 = vmul.f32 %v690, %v697
        %v711 = vmul.f32 %v686, %v701
        %s712 = scalar_lea.vmem [#allocation8], 32
        %v713 = vld [vmem:[%s712] sm:$0xff]
        %v714 = vld [vmem:[%s712 + $0x8] sm:$0xff]
        %v715 = vld [vmem:[%s712 + $0x10] sm:$0xff]
        %v716 = vld [vmem:[%s712 + $0x18] sm:$0xff]
        %718 = vset.pattern.permute.xlu0 0
        %719 = vperm.xlu0 %718, %v713
        %v720 = vpop.permute.xlu0 %719
        %723 = vset.pattern.permute.xlu0 0
        %724 = vperm.xlu0 %723, %v714
        %v725 = vpop.permute.xlu0 %724
        %728 = vset.pattern.permute.xlu0 0
        %729 = vperm.xlu0 %728, %v715
        %v730 = vpop.permute.xlu0 %729
        %733 = vset.pattern.permute.xlu0 0
        %734 = vperm.xlu0 %733, %v716
        %v735 = vpop.permute.xlu0 %734
        %v737 = vmul.f32 %v704, %v720
        %v738 = vmul.f32 %v705, %v720
        %v739 = vmul.f32 %v706, %v725
        %v740 = vmul.f32 %v707, %v725
        %v741 = vmul.f32 %v708, %v730
        %v742 = vmul.f32 %v709, %v730
        %v743 = vmul.f32 %v710, %v735
        %v744 = vmul.f32 %v711, %v735
        %v745 = vadd.f32 %v658, %v737
        %v746 = vadd.f32 %v659, %v738
        %v747 = vadd.f32 %v660, %v739
        %v748 = vadd.f32 %v661, %v740
        %v749 = vadd.f32 %v662, %v741
        %v750 = vadd.f32 %v663, %v742
        %v751 = vadd.f32 %v664, %v743
        %v752 = vadd.f32 %v665, %v744
        %753 = vrot.lane.b32.xlu0 %v538, 15
        %v754 = vpop.permute.xlu0 %753
        %755 = vrot.lane.b32.xlu0 %v540, 15
        %v756 = vpop.permute.xlu0 %755
        %757 = vrot.lane.b32.xlu0 %v542, 15
        %v758 = vpop.permute.xlu0 %757
        %759 = vrot.lane.b32.xlu0 %v544, 15
        %v760 = vpop.permute.xlu0 %759
        %761 = vrot.lane.b32.xlu0 %v539, 15
        %v762 = vpop.permute.xlu0 %761
        %763 = vrot.lane.b32.xlu0 %v541, 15
        %v764 = vpop.permute.xlu0 %763
        %765 = vrot.lane.b32.xlu0 %v543, 15
        %v766 = vpop.permute.xlu0 %765
        %767 = vrot.lane.b32.xlu0 %v545, 15
        %v768 = vpop.permute.xlu0 %767
        %vm769 = vcmp.lt.s32.totalorder %v596, 15
        %v770 = vsel %vm769, %v754, %v762
        %v771 = vsel %vm769, %v756, %v764
        %v772 = vsel %vm769, %v758, %v766
        %v773 = vsel %vm769, %v760, %v768
        %v774 = vsel %vm769, %v762, %v754
        %v775 = vsel %vm769, %v764, %v756
        %v776 = vsel %vm769, %v766, %v758
        %v777 = vsel %vm769, %v768, %v760
        %s778 = scalar_lea.vmem [#allocation11], 4
        %v779 = vld [vmem:[%s778] sm:$0x3]
        %v781 = vlaneseq
        %v782 = vshrl.u32 %v781, 7
        %v783 = vsub.s32 0, %v782
        %v784 = vrot.slane %v779, %v783
        %v785 = vlaneseq
        %v786 = vshrl.u32 %v785, 7
        %v787 = vsub.s32 1, %v786
        %v788 = vrot.slane %v779, %v787
        %v791 = vmul.f32 %v774, %v784
        %v792 = vmul.f32 %v770, %v788
        %v793 = vmul.f32 %v775, %v784
        %v794 = vmul.f32 %v771, %v788
        %v795 = vmul.f32 %v776, %v784
        %v796 = vmul.f32 %v772, %v788
        %v797 = vmul.f32 %v777, %v784
        %v798 = vmul.f32 %v773, %v788
        %s799 = scalar_lea.vmem [#allocation8], 64
        %v800 = vld [vmem:[%s799] sm:$0xff]
        %v801 = vld [vmem:[%s799 + $0x8] sm:$0xff]
        %v802 = vld [vmem:[%s799 + $0x10] sm:$0xff]
        %v803 = vld [vmem:[%s799 + $0x18] sm:$0xff]
        %805 = vset.pattern.permute.xlu0 0
        %806 = vperm.xlu0 %805, %v800
        %v807 = vpop.permute.xlu0 %806
        %810 = vset.pattern.permute.xlu0 0
        %811 = vperm.xlu0 %810, %v801
        %v812 = vpop.permute.xlu0 %811
        %815 = vset.pattern.permute.xlu0 0
        %816 = vperm.xlu0 %815, %v802
        %v817 = vpop.permute.xlu0 %816
        %820 = vset.pattern.permute.xlu0 0
        %821 = vperm.xlu0 %820, %v803
        %v822 = vpop.permute.xlu0 %821
        %v824 = vmul.f32 %v791, %v807
        %v825 = vmul.f32 %v792, %v807
        %v826 = vmul.f32 %v793, %v812
        %v827 = vmul.f32 %v794, %v812
        %v828 = vmul.f32 %v795, %v817
        %v829 = vmul.f32 %v796, %v817
        %v830 = vmul.f32 %v797, %v822
        %v831 = vmul.f32 %v798, %v822
        %v832 = vadd.f32 %v745, %v824
        %v833 = vadd.f32 %v746, %v825
        %v834 = vadd.f32 %v747, %v826
        %v835 = vadd.f32 %v748, %v827
        %v836 = vadd.f32 %v749, %v828
        %v837 = vadd.f32 %v750, %v829
        %v838 = vadd.f32 %v751, %v830
        %v839 = vadd.f32 %v752, %v831
        %840 = vrot.lane.b32.xlu0 %v538, 1
        %v841 = vpop.permute.xlu0 %840
        %842 = vrot.lane.b32.xlu0 %v540, 1
        %v843 = vpop.permute.xlu0 %842
        %844 = vrot.lane.b32.xlu0 %v542, 1
        %v845 = vpop.permute.xlu0 %844
        %846 = vrot.lane.b32.xlu0 %v544, 1
        %v847 = vpop.permute.xlu0 %846
        %848 = vrot.lane.b32.xlu0 %v539, 1
        %v849 = vpop.permute.xlu0 %848
        %850 = vrot.lane.b32.xlu0 %v541, 1
        %v851 = vpop.permute.xlu0 %850
        %852 = vrot.lane.b32.xlu0 %v543, 1
        %v853 = vpop.permute.xlu0 %852
        %854 = vrot.lane.b32.xlu0 %v545, 1
        %v855 = vpop.permute.xlu0 %854
        %vm856 = vcmp.lt.s32.totalorder %v596, 1
        %v857 = vsel %vm856, %v841, %v849
        %v858 = vsel %vm856, %v843, %v851
        %v859 = vsel %vm856, %v845, %v853
        %v860 = vsel %vm856, %v847, %v855
        %v861 = vsel %vm856, %v849, %v841
        %v862 = vsel %vm856, %v851, %v843
        %v863 = vsel %vm856, %v853, %v845
        %v864 = vsel %vm856, %v855, %v847
        %s865 = scalar_lea.vmem [#allocation11], 6
        %v866 = vld [vmem:[%s865] sm:$0x3]
        %v868 = vlaneseq
        %v869 = vshrl.u32 %v868, 7
        %v870 = vsub.s32 0, %v869
        %v871 = vrot.slane %v866, %v870
        %v872 = vlaneseq
        %v873 = vshrl.u32 %v872, 7
        %v874 = vsub.s32 1, %v873
        %v875 = vrot.slane %v866, %v874
        %v878 = vmul.f32 %v861, %v871
        %v879 = vmul.f32 %v857, %v875
        %v880 = vmul.f32 %v862, %v871
        %v881 = vmul.f32 %v858, %v875
        %v882 = vmul.f32 %v863, %v871
        %v883 = vmul.f32 %v859, %v875
        %v884 = vmul.f32 %v864, %v871
        %v885 = vmul.f32 %v860, %v875
        %s886 = scalar_lea.vmem [#allocation8], 96
        %v887 = vld [vmem:[%s886] sm:$0xff]
        %v888 = vld [vmem:[%s886 + $0x8] sm:$0xff]
        %v889 = vld [vmem:[%s886 + $0x10] sm:$0xff]
        %v890 = vld [vmem:[%s886 + $0x18] sm:$0xff]
        %892 = vset.pattern.permute.xlu0 0
        %893 = vperm.xlu0 %892, %v887
        %v894 = vpop.permute.xlu0 %893
        %897 = vset.pattern.permute.xlu0 0
        %898 = vperm.xlu0 %897, %v888
        %v899 = vpop.permute.xlu0 %898
        %902 = vset.pattern.permute.xlu0 0
        %903 = vperm.xlu0 %902, %v889
        %v904 = vpop.permute.xlu0 %903
        %907 = vset.pattern.permute.xlu0 0
        %908 = vperm.xlu0 %907, %v890
        %v909 = vpop.permute.xlu0 %908
        %v911 = vmul.f32 %v878, %v894
        %v912 = vmul.f32 %v879, %v894
        %v913 = vmul.f32 %v880, %v899
        %v914 = vmul.f32 %v881, %v899
        %v915 = vmul.f32 %v882, %v904
        %v916 = vmul.f32 %v883, %v904
        %v917 = vmul.f32 %v884, %v909
        %v918 = vmul.f32 %v885, %v909
        %v919 = vadd.f32 %v832, %v911
        %v920 = vadd.f32 %v833, %v912
        %v921 = vadd.f32 %v834, %v913
        %v922 = vadd.f32 %v835, %v914
        %v923 = vadd.f32 %v836, %v915
        %v924 = vadd.f32 %v837, %v916
        %v925 = vadd.f32 %v838, %v917
        %v926 = vadd.f32 %v839, %v918
        %927 = vrot.lane.b32.xlu0 %v538, 127
        %v928 = vpop.permute.xlu0 %927
        %929 = vrot.lane.b32.xlu0 %v540, 127
        %v930 = vpop.permute.xlu0 %929
        %931 = vrot.lane.b32.xlu0 %v542, 127
        %v932 = vpop.permute.xlu0 %931
        %933 = vrot.lane.b32.xlu0 %v544, 127
        %v934 = vpop.permute.xlu0 %933
        %935 = vrot.lane.b32.xlu0 %v539, 127
        %v936 = vpop.permute.xlu0 %935
        %937 = vrot.lane.b32.xlu0 %v541, 127
        %v938 = vpop.permute.xlu0 %937
        %939 = vrot.lane.b32.xlu0 %v543, 127
        %v940 = vpop.permute.xlu0 %939
        %941 = vrot.lane.b32.xlu0 %v545, 127
        %v942 = vpop.permute.xlu0 %941
        %vm943 = vcmp.lt.s32.totalorder %v596, 127
        %v944 = vsel %vm943, %v928, %v936
        %v945 = vsel %vm943, %v930, %v938
        %v946 = vsel %vm943, %v932, %v940
        %v947 = vsel %vm943, %v934, %v942
        %v948 = vsel %vm943, %v936, %v928
        %v949 = vsel %vm943, %v938, %v930
        %v950 = vsel %vm943, %v940, %v932
        %v951 = vsel %vm943, %v942, %v934
        %s952 = scalar_lea.vmem [#allocation11], 10
        %v953 = vld [vmem:[%s952] sm:$0x3]
        %v955 = vlaneseq
        %v956 = vshrl.u32 %v955, 7
        %v957 = vsub.s32 0, %v956
        %v958 = vrot.slane %v953, %v957
        %v959 = vlaneseq
        %v960 = vshrl.u32 %v959, 7
        %v961 = vsub.s32 1, %v960
        %v962 = vrot.slane %v953, %v961
        %v965 = vmul.f32 %v944, %v958
        %v966 = vmul.f32 %v948, %v962
        %v967 = vmul.f32 %v945, %v958
        %v968 = vmul.f32 %v949, %v962
        %v969 = vmul.f32 %v946, %v958
        %v970 = vmul.f32 %v950, %v962
        %v971 = vmul.f32 %v947, %v958
        %v972 = vmul.f32 %v951, %v962
        %s973 = scalar_lea.vmem [#allocation8], 160
        %v974 = vld [vmem:[%s973] sm:$0xff]
        %v975 = vld [vmem:[%s973 + $0x8] sm:$0xff]
        %v976 = vld [vmem:[%s973 + $0x10] sm:$0xff]
        %v977 = vld [vmem:[%s973 + $0x18] sm:$0xff]
        %979 = vset.pattern.permute.xlu0 0
        %980 = vperm.xlu0 %979, %v974
        %v981 = vpop.permute.xlu0 %980
        %984 = vset.pattern.permute.xlu0 0
        %985 = vperm.xlu0 %984, %v975
        %v986 = vpop.permute.xlu0 %985
        %989 = vset.pattern.permute.xlu0 0
        %990 = vperm.xlu0 %989, %v976
        %v991 = vpop.permute.xlu0 %990
        %994 = vset.pattern.permute.xlu0 0
        %995 = vperm.xlu0 %994, %v977
        %v996 = vpop.permute.xlu0 %995
        %v998 = vmul.f32 %v965, %v981
        %v999 = vmul.f32 %v966, %v981
        %v1000 = vmul.f32 %v967, %v986
        %v1001 = vmul.f32 %v968, %v986
        %v1002 = vmul.f32 %v969, %v991
        %v1003 = vmul.f32 %v970, %v991
        %v1004 = vmul.f32 %v971, %v996
        %v1005 = vmul.f32 %v972, %v996
        %v1006 = vadd.f32 %v919, %v998
        %v1007 = vadd.f32 %v920, %v999
        %v1008 = vadd.f32 %v921, %v1000
        %v1009 = vadd.f32 %v922, %v1001
        %v1010 = vadd.f32 %v923, %v1002
        %v1011 = vadd.f32 %v924, %v1003
        %v1012 = vadd.f32 %v925, %v1004
        %v1013 = vadd.f32 %v926, %v1005
        %1014 = vrot.lane.b32.xlu0 %v538, 113
        %v1015 = vpop.permute.xlu0 %1014
        %1016 = vrot.lane.b32.xlu0 %v540, 113
        %v1017 = vpop.permute.xlu0 %1016
        %1018 = vrot.lane.b32.xlu0 %v542, 113
        %v1019 = vpop.permute.xlu0 %1018
        %1020 = vrot.lane.b32.xlu0 %v544, 113
        %v1021 = vpop.permute.xlu0 %1020
        %1022 = vrot.lane.b32.xlu0 %v539, 113
        %v1023 = vpop.permute.xlu0 %1022
        %1024 = vrot.lane.b32.xlu0 %v541, 113
        %v1025 = vpop.permute.xlu0 %1024
        %1026 = vrot.lane.b32.xlu0 %v543, 113
        %v1027 = vpop.permute.xlu0 %1026
        %1028 = vrot.lane.b32.xlu0 %v545, 113
        %v1029 = vpop.permute.xlu0 %1028
        %vm1030 = vcmp.lt.s32.totalorder %v596, 113
        %v1031 = vsel %vm1030, %v1015, %v1023
        %v1032 = vsel %vm1030, %v1017, %v1025
        %v1033 = vsel %vm1030, %v1019, %v1027
        %v1034 = vsel %vm1030, %v1021, %v1029
        %v1035 = vsel %vm1030, %v1023, %v1015
        %v1036 = vsel %vm1030, %v1025, %v1017
        %v1037 = vsel %vm1030, %v1027, %v1019
        %v1038 = vsel %vm1030, %v1029, %v1021
        %s1039 = scalar_lea.vmem [#allocation11], 12
        %v1040 = vld [vmem:[%s1039] sm:$0x3]
        %v1042 = vlaneseq
        %v1043 = vshrl.u32 %v1042, 7
        %v1044 = vsub.s32 0, %v1043
        %v1045 = vrot.slane %v1040, %v1044
        %v1046 = vlaneseq
        %v1047 = vshrl.u32 %v1046, 7
        %v1048 = vsub.s32 1, %v1047
        %v1049 = vrot.slane %v1040, %v1048
        %v1052 = vmul.f32 %v1031, %v1045
        %v1053 = vmul.f32 %v1035, %v1049
        %v1054 = vmul.f32 %v1032, %v1045
        %v1055 = vmul.f32 %v1036, %v1049
        %v1056 = vmul.f32 %v1033, %v1045
        %v1057 = vmul.f32 %v1037, %v1049
        %v1058 = vmul.f32 %v1034, %v1045
        %v1059 = vmul.f32 %v1038, %v1049
        %s1060 = scalar_lea.vmem [#allocation8], 192
        %v1061 = vld [vmem:[%s1060] sm:$0xff]
        %v1062 = vld [vmem:[%s1060 + $0x8] sm:$0xff]
        %v1063 = vld [vmem:[%s1060 + $0x10] sm:$0xff]
        %v1064 = vld [vmem:[%s1060 + $0x18] sm:$0xff]
        %1066 = vset.pattern.permute.xlu0 0
        %1067 = vperm.xlu0 %1066, %v1061
        %v1068 = vpop.permute.xlu0 %1067
        %1071 = vset.pattern.permute.xlu0 0
        %1072 = vperm.xlu0 %1071, %v1062
        %v1073 = vpop.permute.xlu0 %1072
        %1076 = vset.pattern.permute.xlu0 0
        %1077 = vperm.xlu0 %1076, %v1063
        %v1078 = vpop.permute.xlu0 %1077
        %1081 = vset.pattern.permute.xlu0 0
        %1082 = vperm.xlu0 %1081, %v1064
        %v1083 = vpop.permute.xlu0 %1082
        %v1085 = vmul.f32 %v1052, %v1068
        %v1086 = vmul.f32 %v1053, %v1068
        %v1087 = vmul.f32 %v1054, %v1073
        %v1088 = vmul.f32 %v1055, %v1073
        %v1089 = vmul.f32 %v1056, %v1078
        %v1090 = vmul.f32 %v1057, %v1078
        %v1091 = vmul.f32 %v1058, %v1083
        %v1092 = vmul.f32 %v1059, %v1083
        %v1093 = vadd.f32 %v1006, %v1085
        %v1094 = vadd.f32 %v1007, %v1086
        %v1095 = vadd.f32 %v1008, %v1087
        %v1096 = vadd.f32 %v1009, %v1088
        %v1097 = vadd.f32 %v1010, %v1089
        %v1098 = vadd.f32 %v1011, %v1090
        %v1099 = vadd.f32 %v1012, %v1091
        %v1100 = vadd.f32 %v1013, %v1092
        %1101 = vrot.lane.b32.xlu0 %v538, 112
        %v1102 = vpop.permute.xlu0 %1101
        %1103 = vrot.lane.b32.xlu0 %v540, 112
        %v1104 = vpop.permute.xlu0 %1103
        %1105 = vrot.lane.b32.xlu0 %v542, 112
        %v1106 = vpop.permute.xlu0 %1105
        %1107 = vrot.lane.b32.xlu0 %v544, 112
        %v1108 = vpop.permute.xlu0 %1107
        %1109 = vrot.lane.b32.xlu0 %v539, 112
        %v1110 = vpop.permute.xlu0 %1109
        %1111 = vrot.lane.b32.xlu0 %v541, 112
        %v1112 = vpop.permute.xlu0 %1111
        %1113 = vrot.lane.b32.xlu0 %v543, 112
        %v1114 = vpop.permute.xlu0 %1113
        %1115 = vrot.lane.b32.xlu0 %v545, 112
        %v1116 = vpop.permute.xlu0 %1115
        %vm1117 = vcmp.lt.s32.totalorder %v596, 112
        %v1118 = vsel %vm1117, %v1102, %v1110
        %v1119 = vsel %vm1117, %v1104, %v1112
        %v1120 = vsel %vm1117, %v1106, %v1114
        %v1121 = vsel %vm1117, %v1108, %v1116
        %v1122 = vsel %vm1117, %v1110, %v1102
        %v1123 = vsel %vm1117, %v1112, %v1104
        %v1124 = vsel %vm1117, %v1114, %v1106
        %v1125 = vsel %vm1117, %v1116, %v1108
        %s1126 = scalar_lea.vmem [#allocation11], 14
        %v1127 = vld [vmem:[%s1126] sm:$0x3]
        %v1129 = vlaneseq
        %v1130 = vshrl.u32 %v1129, 7
        %v1131 = vsub.s32 0, %v1130
        %v1132 = vrot.slane %v1127, %v1131
        %v1133 = vlaneseq
        %v1134 = vshrl.u32 %v1133, 7
        %v1135 = vsub.s32 1, %v1134
        %v1136 = vrot.slane %v1127, %v1135
        %v1139 = vmul.f32 %v1118, %v1132
        %v1140 = vmul.f32 %v1122, %v1136
        %v1141 = vmul.f32 %v1119, %v1132
        %v1142 = vmul.f32 %v1123, %v1136
        %v1143 = vmul.f32 %v1120, %v1132
        %v1144 = vmul.f32 %v1124, %v1136
        %v1145 = vmul.f32 %v1121, %v1132
        %v1146 = vmul.f32 %v1125, %v1136
        %s1147 = scalar_lea.vmem [#allocation8], 224
        %v1148 = vld [vmem:[%s1147] sm:$0xff]
        %v1149 = vld [vmem:[%s1147 + $0x8] sm:$0xff]
        %v1150 = vld [vmem:[%s1147 + $0x10] sm:$0xff]
        %v1151 = vld [vmem:[%s1147 + $0x18] sm:$0xff]
        %1153 = vset.pattern.permute.xlu0 0
        %1154 = vperm.xlu0 %1153, %v1148
        %v1155 = vpop.permute.xlu0 %1154
        %1158 = vset.pattern.permute.xlu0 0
        %1159 = vperm.xlu0 %1158, %v1149
        %v1160 = vpop.permute.xlu0 %1159
        %1163 = vset.pattern.permute.xlu0 0
        %1164 = vperm.xlu0 %1163, %v1150
        %v1165 = vpop.permute.xlu0 %1164
        %1168 = vset.pattern.permute.xlu0 0
        %1169 = vperm.xlu0 %1168, %v1151
        %v1170 = vpop.permute.xlu0 %1169
        %v1172 = vmul.f32 %v1139, %v1155
        %v1173 = vmul.f32 %v1140, %v1155
        %v1174 = vmul.f32 %v1141, %v1160
        %v1175 = vmul.f32 %v1142, %v1160
        %v1176 = vmul.f32 %v1143, %v1165
        %v1177 = vmul.f32 %v1144, %v1165
        %v1178 = vmul.f32 %v1145, %v1170
        %v1179 = vmul.f32 %v1146, %v1170
        %v1180 = vadd.f32 %v1093, %v1172
        %v1181 = vadd.f32 %v1094, %v1173
        %v1182 = vadd.f32 %v1095, %v1174
        %v1183 = vadd.f32 %v1096, %v1175
        %v1184 = vadd.f32 %v1097, %v1176
        %v1185 = vadd.f32 %v1098, %v1177
        %v1186 = vadd.f32 %v1099, %v1178
        %v1187 = vadd.f32 %v1100, %v1179
        %1188 = vrot.lane.b32.xlu0 %v538, 111
        %v1189 = vpop.permute.xlu0 %1188
        %1190 = vrot.lane.b32.xlu0 %v540, 111
        %v1191 = vpop.permute.xlu0 %1190
        %1192 = vrot.lane.b32.xlu0 %v542, 111
        %v1193 = vpop.permute.xlu0 %1192
        %1194 = vrot.lane.b32.xlu0 %v544, 111
        %v1195 = vpop.permute.xlu0 %1194
        %1196 = vrot.lane.b32.xlu0 %v539, 111
        %v1197 = vpop.permute.xlu0 %1196
        %1198 = vrot.lane.b32.xlu0 %v541, 111
        %v1199 = vpop.permute.xlu0 %1198
        %1200 = vrot.lane.b32.xlu0 %v543, 111
        %v1201 = vpop.permute.xlu0 %1200
        %1202 = vrot.lane.b32.xlu0 %v545, 111
        %v1203 = vpop.permute.xlu0 %1202
        %vm1204 = vcmp.lt.s32.totalorder %v596, 111
        %v1205 = vsel %vm1204, %v1189, %v1197
        %v1206 = vsel %vm1204, %v1191, %v1199
        %v1207 = vsel %vm1204, %v1193, %v1201
        %v1208 = vsel %vm1204, %v1195, %v1203
        %v1209 = vsel %vm1204, %v1197, %v1189
        %v1210 = vsel %vm1204, %v1199, %v1191
        %v1211 = vsel %vm1204, %v1201, %v1193
        %v1212 = vsel %vm1204, %v1203, %v1195
        %s1213 = scalar_lea.vmem [#allocation11], 16
        %v1214 = vld [vmem:[%s1213] sm:$0x3]
        %v1216 = vlaneseq
        %v1217 = vshrl.u32 %v1216, 7
        %v1218 = vsub.s32 0, %v1217
        %v1219 = vrot.slane %v1214, %v1218
        %v1220 = vlaneseq
        %v1221 = vshrl.u32 %v1220, 7
        %v1222 = vsub.s32 1, %v1221
        %v1223 = vrot.slane %v1214, %v1222
        %v1226 = vmul.f32 %v1205, %v1219
        %v1227 = vmul.f32 %v1209, %v1223
        %v1228 = vmul.f32 %v1206, %v1219
        %v1229 = vmul.f32 %v1210, %v1223
        %v1230 = vmul.f32 %v1207, %v1219
        %v1231 = vmul.f32 %v1211, %v1223
        %v1232 = vmul.f32 %v1208, %v1219
        %v1233 = vmul.f32 %v1212, %v1223
        %s1234 = scalar_lea.vmem [#allocation8], 256
        %v1235 = vld [vmem:[%s1234] sm:$0xff]
        %v1236 = vld [vmem:[%s1234 + $0x8] sm:$0xff]
        %v1237 = vld [vmem:[%s1234 + $0x10] sm:$0xff]
        %v1238 = vld [vmem:[%s1234 + $0x18] sm:$0xff]
        %1240 = vset.pattern.permute.xlu0 0
        %1241 = vperm.xlu0 %1240, %v1235
        %v1242 = vpop.permute.xlu0 %1241
        %1245 = vset.pattern.permute.xlu0 0
        %1246 = vperm.xlu0 %1245, %v1236
        %v1247 = vpop.permute.xlu0 %1246
        %1250 = vset.pattern.permute.xlu0 0
        %1251 = vperm.xlu0 %1250, %v1237
        %v1252 = vpop.permute.xlu0 %1251
        %1255 = vset.pattern.permute.xlu0 0
        %1256 = vperm.xlu0 %1255, %v1238
        %v1257 = vpop.permute.xlu0 %1256
        %v1259 = vmul.f32 %v1226, %v1242
        %v1260 = vmul.f32 %v1227, %v1242
        %v1261 = vmul.f32 %v1228, %v1247
        %v1262 = vmul.f32 %v1229, %v1247
        %v1263 = vmul.f32 %v1230, %v1252
        %v1264 = vmul.f32 %v1231, %v1252
        %v1265 = vmul.f32 %v1232, %v1257
        %v1266 = vmul.f32 %v1233, %v1257
        %v1267 = vadd.f32 %v1180, %v1259
        %v1268 = vadd.f32 %v1181, %v1260
        %v1269 = vadd.f32 %v1182, %v1261
        %v1270 = vadd.f32 %v1183, %v1262
        %v1271 = vadd.f32 %v1184, %v1263
        %v1272 = vadd.f32 %v1185, %v1264
        %v1273 = vadd.f32 %v1186, %v1265
        %v1274 = vadd.f32 %v1187, %v1266
        %v1275 = vld [vmem:[#allocation10] sm:$0xff]
        %v1276 = vld [vmem:[#allocation10 + $0x8] sm:$0xff]
        %v1277 = vld [vmem:[#allocation10 + $0x10] sm:$0xff]
        %v1278 = vld [vmem:[#allocation10 + $0x18] sm:$0xff]
        %1280 = vset.pattern.permute.xlu0 0
        %1281 = vperm.xlu0 %1280, %v1275
        %v1282 = vpop.permute.xlu0 %1281
        %1285 = vset.pattern.permute.xlu0 0
        %1286 = vperm.xlu0 %1285, %v1276
        %v1287 = vpop.permute.xlu0 %1286
        %1290 = vset.pattern.permute.xlu0 0
        %1291 = vperm.xlu0 %1290, %v1277
        %v1292 = vpop.permute.xlu0 %1291
        %1295 = vset.pattern.permute.xlu0 0
        %1296 = vperm.xlu0 %1295, %v1278
        %v1297 = vpop.permute.xlu0 %1296
        %v1299 = vadd.f32 %v1267, %v1282
        %v1300 = vadd.f32 %v1268, %v1282
        %v1301 = vadd.f32 %v1269, %v1287
        %v1302 = vadd.f32 %v1270, %v1287
        %v1303 = vadd.f32 %v1271, %v1292
        %v1304 = vadd.f32 %v1272, %v1292
        %v1305 = vadd.f32 %v1273, %v1297
        %v1306 = vadd.f32 %v1274, %v1297
        %v1307 = vmax.f32 %v1299, 0.0
        %v1308 = vmax.f32 %v1300, 0.0
        %v1309 = vmax.f32 %v1301, 0.0
        %v1310 = vmax.f32 %v1302, 0.0
        %v1311 = vmax.f32 %v1303, 0.0
        %v1312 = vmax.f32 %v1304, 0.0
        %v1313 = vmax.f32 %v1305, 0.0
        %v1314 = vmax.f32 %v1306, 0.0
        %v1315 = vmin.f32 %v1307, 6.0
        %v1316 = vmin.f32 %v1308, 6.0
        %v1317 = vmin.f32 %v1309, 6.0
        %v1318 = vmin.f32 %v1310, 6.0
        %v1319 = vmin.f32 %v1311, 6.0
        %v1320 = vmin.f32 %v1312, 6.0
        %v1321 = vmin.f32 %v1313, 6.0
        %v1322 = vmin.f32 %v1314, 6.0
        %v1323 = vld [vmem:[#allocation13] sm:$0xf]
        %v1324 = vpack.c.bf16 %v1317, %v1315
        %v1325 = vpack.c.bf16 %v1318, %v1316
        %v1326 = vpack.c.bf16 %v1321, %v1319
        %v1327 = vpack.c.bf16 %v1322, %v1320
        %v1328 = vld [vmem:[#allocation14] sm:$0xff]
        %1330 = vset.pattern.permute.xlu0 0
        %1331 = vperm.xlu0 %1330, %v1328
        %v1332 = vpop.permute.xlu0 %1331
        %vm1334 = vcmask 261120
        %v1336 = vsel %vm1334, %v1323, 0
        %1338 = vmatprep.subr.bf16.mxu0 %v1325
        %1339 = vmatpush1.bf16.msra.mxu0 %v1324
        %1340 = vmatprep.subr.bf16.mxu0 %v1327
        %1341 = vmatpush1.bf16.msra.mxu0 %v1326
        %1342 = vmatprep.subr.bf16.mxu0 0
        %1343 = vmatpush1.bf16.msra.mxu0 0
        %1344 = vmatprep.subr.bf16.mxu0 0
        %1345 = vmatpush1.bf16.msra.mxu0 0
        %1346 = vmatprep.subr.bf16.mxu0 0
        %1347 = vmatpush1.bf16.msra.mxu0 0
        %1348 = vmatprep.subr.bf16.mxu0 0
        %1349 = vmatpush1.bf16.msra.mxu0 0
        %1350 = vmatprep.subr.bf16.mxu0 0
        %1351 = vmatpush1.bf16.msra.mxu0 0
        %1352 = vmatprep.subr.bf16.mxu0 0
        %1353 = vmatpush1.bf16.msra.mxu0 0
        %1354 = vmatprep.subr.bf16.mxu0 0
        %1355 = vmatpush1.bf16.msra.mxu0 0
        %1356 = vmatprep.subr.bf16.mxu0 0
        %1357 = vmatpush1.bf16.msra.mxu0 0
        %1358 = vmatprep.subr.bf16.mxu0 0
        %1359 = vmatpush1.bf16.msra.mxu0 0
        %1360 = vmatprep.subr.bf16.mxu0 0
        %1361 = vmatpush1.bf16.msra.mxu0 0
        %1362 = vmatprep.subr.bf16.mxu0 0
        %1363 = vmatpush1.bf16.msra.mxu0 0
        %1364 = vmatprep.subr.bf16.mxu0 0
        %1365 = vmatpush1.bf16.msra.mxu0 0
        %1366 = vmatprep.subr.bf16.mxu0 0
        %1367 = vmatpush1.bf16.msra.mxu0 0
        %1368 = vmatprep.subr.bf16.mxu0 0
        %1369 = vmatpush1.bf16.msra.mxu0 0
        %1370 = vmatprep.mubr.bf16.mxu0 0
        %1371 = vmatmul.mubr.bf16.gmra.mrb[0].mxu0 %v1336
        %v1372 = vpop.f32.mrb[0].mxu0
        %v1373 = vadd.f32 %v1332, %v1372
        %v1374 = vpop.f32.mrb[0].mxu0
        %v1375 = vadd.f32 %v1332, %v1374
        %v1376 = vpop.f32.mrb[0].mxu0
        %v1377 = vpop.f32.mrb[0].mxu0
        %1378 = vdwg.mxu0
        %v1379 = vadd.f32 %v1373, %v421
        %v1380 = vadd.f32 %v1375, %v422
        %1381 = vst [vmem:[%s419] sm:$0xff] %v1379
        %1382 = vst [vmem:[%s419 + $0x8] sm:$0xff] %v1380
        %s1383 = sand.u32 %s210, 1
        %s1384 = scalar_lea.sflag [#allocation4], %s1383
        %s1385 = sand.u32 %s210, 1
        %s1386 = smul.addr %s1385, 16
        %s1387 = scalar_lea.vmem [#allocation16], %s1386
        // Predicated region
        $region85: #{tpu_custom_call.1} parent=51 // pred_check
          %p1388 = pneg %p220
        $region86: #{tpu_custom_call.1} parent=51 // pred_check_branch
          %1390 = sbr.rel (%p1388) target = $region88
        $region87: #{tpu_custom_call.1} parent=51 // pred_region
          %s1392 = ssub.s32 256, 256
          %1393 = vsyncadd %s1384, %s1392
          %s1394 = smul.addr %s29, 2
          %s1395 = smul.addr %s1394, 128
          %s1396 = scalar_lea.hbm %s8, %s1395
          %s1398 = sshll.u32 %s1387, 4
          %s1399 = int_to_ptr.vmem [resolvable:$true] %s1398
          %1401 = dma.vmem_to_hbm [thread:$0]  %s1399, 256, %s1396, %s1384
        $region88: #{tpu_custom_call.1} parent=51 // pred_fallthru
          _
      $region52: #{tpu_custom_call.1} parent=5 // pred_fallthru
        _
      %p1402 = scmp.le.s32.totalorder 2, %s24
      // Predicated region
      $region89: #{tpu_custom_call.1} parent=5 // pred_check
        %p1403 = pneg %p1402
      $region90: #{tpu_custom_call.1} parent=5 // pred_check_branch
        %1405 = sbr.rel (%p1403) target = $region92
      $region91: #{tpu_custom_call.1} parent=5 // pred_region
        %s1406 = ssub.s32 %s24, 2
        // Predicated region
        $region93: #{tpu_custom_call.1} parent=91 // pred_check
          %p1407 = pneg %p226
        $region94: #{tpu_custom_call.1} parent=91 // pred_check_branch
          %1409 = sbr.rel (%p1407) target = $region96
        $region95: #{tpu_custom_call.1} parent=91 // pred_region
          %s1410 = sand.u32 %s211, 1
          %s1411 = scalar_lea.sflag [#allocation4], %s1410
          %s1412 = sand.u32 %s211, 1
          %s1413 = smul.addr %s1412, 16
          %s1414 = scalar_lea.vmem [#allocation16], %s1413
          %1415 = dma.done %s1411, 256
        $region96: #{tpu_custom_call.1} parent=91 // pred_fallthru
          _
      $region92: #{tpu_custom_call.1} parent=5 // pred_fallthru
        _
    $region6: #{tpu_custom_call.1} parent=1 // loop_footer
      %s28 = sadd.s32 1, %s24
    $region7: #{tpu_custom_call.1} parent=1 // loop_footer_branch
      %23 = sbr.rel target = $region3
    $region8: #{tpu_custom_call.1} parent=1 // loop_exit
      _
    %1416 = vsyncpa [#allocation3], 1
    %s1417 = scalar_lea.sflag [#allocation3], 1
    %1418 = vsyncpa %s1417, 1
    %1419 = vsyncpa [#allocation6], 1
    %1420 = vsyncpa [#allocation9], 1
    %1421 = vsyncpa [#allocation12], 1
    %1422 = vsyncpa [#allocation15], 1
    %1423 = vsyncpa [#allocation4], 1
    %s1424 = scalar_lea.sflag [#allocation4], 1
    %1425 = vsyncpa %s1424, 1

</llo_original>
